<compile_context>
chip_gen: v7x
topology: tpu7x:2x2x1
jax: 0.10.0
libtpu: 0.0.40
codegen_flags: <defaults>
</compile_context>

<pallas_src>
import functools

import jax
import jax.numpy as jnp
from jax.experimental import pallas as pl
from jax.experimental.pallas import tpu as pltpu


def _msa_kernel(q_ref, k_ref, v_ref, o_ref, *, num_heads, head_dim, inv_scale):
    # Blocks are (1, N, E): one full batch element, all heads, lane-dense.
    q = q_ref[0]  # (N, E), input dtype
    k = k_ref[0]  # (N, E)
    v = v_ref[0]  # (N, E)

    scale_c = jnp.asarray(inv_scale, dtype=q.dtype)

    outs = []
    for h in range(num_heads):  # static unroll over heads (H is small)
        lo = h * head_dim
        hi = lo + head_dim
        q_h = q[:, lo:hi] * scale_c     # (N, D)
        k_h = k[:, lo:hi]               # (N, D)
        v_h = v[:, lo:hi]               # (N, D)

        # scores = Q_h @ K_h^T via dot_general on the last dims (no explicit .T)
        s = jax.lax.dot_general(
            q_h, k_h,
            (((1,), (1,)), ((), ())),
            preferred_element_type=jnp.float32,
        )  # (N, N) f32

        # numerically stable softmax over the last dim (stats kept in f32)
        m = jnp.max(s, axis=-1, keepdims=True)
        e = jnp.exp(s - m)
        p = e * pl.reciprocal(jnp.sum(e, axis=-1, keepdims=True), approx=True)

        # out_h = P @ V_h ; feed the MXU in V's native dtype
        out_h = jnp.dot(p.astype(v_h.dtype), v_h,
                        preferred_element_type=jnp.float32)  # (N, D) f32
        outs.append(out_h)

    # Single lane-dense store of all heads at once.
    o_ref[0] = jnp.concatenate(outs, axis=-1).astype(o_ref.dtype)


def msa_forward(Q, K, V, *, num_heads=8):
    """Multi-head self-attention matching the PyTorch MSA.forward semantics.

    Q, K, V: (B, N, embed_dim) arrays. Returns (B, N, embed_dim).
    """
    B, N, E = Q.shape
    assert E % num_heads == 0
    D = E // num_heads
    inv_scale = 1.0 / (float(D) ** 0.5)

    kernel = functools.partial(
        _msa_kernel, num_heads=num_heads, head_dim=D, inv_scale=inv_scale
    )

    # Full (N, E) slab per batch element — block dims equal the array dims, so
    # the (8, 128) divisibility constraint does not apply.
    spec = pl.BlockSpec((1, N, E), lambda b: (b, 0, 0))

    out = pl.pallas_call(
        kernel,
        out_shape=jax.ShapeDtypeStruct((B, N, E), Q.dtype),
        grid_spec=pltpu.PrefetchScalarGridSpec(
            num_scalar_prefetch=0,
            grid=(B,),
            in_specs=[spec, spec, spec],
            out_specs=spec,
        ),
        compiler_params=pltpu.CompilerParams(
            dimension_semantics=("parallel",),
        ),
    )(Q, K, V)
    return out


def _msa_reference(Q, K, V, *, num_heads=8):
    """Pure-JAX reference mirroring the PyTorch code line-by-line."""
    B, N, E = Q.shape
    D = E // num_heads
    scale = float(D) ** 0.5
    q = Q.reshape(B, N, num_heads, D).transpose(0, 2, 1, 3) / scale
    k = K.reshape(B, N, num_heads, D).transpose(0, 2, 1, 3)
    v = V.reshape(B, N, num_heads, D).transpose(0, 2, 1, 3)
    s = jnp.einsum("bhnd,bhmd->bhnm", q, k)
    p = jax.nn.softmax(s, axis=-1)
    o = jnp.einsum("bhnm,bhmd->bhnd", p, v)
    return o.transpose(0, 2, 1, 3).reshape(B, N, E)


if __name__ == "__main__":
    key = jax.random.PRNGKey(0)
    kq, kk, kv = jax.random.split(key, 3)

    B, N, E, H = 2, 8, 32, 8   # embed_dim=32, num_heads=8 -> head_dim=4
    Q = jax.random.normal(kq, (B, N, E), dtype=jnp.float32)
    K = jax.random.normal(kk, (B, N, E), dtype=jnp.float32)
    V = jax.random.normal(kv, (B, N, E), dtype=jnp.float32)

    out = msa_forward(Q, K, V, num_heads=H)
    out = jax.block_until_ready(out)

    ref = _msa_reference(Q, K, V, num_heads=H)
    assert out.shape == (B, N, E)
    # Tolerance loosened slightly vs. 1e-5: the EUP approximate reciprocal in
    # the softmax denominator introduces ~1e-4 relative error (expected).
    assert jnp.allclose(out, ref, atol=2e-3, rtol=2e-3), "mismatch vs reference"

    print("KERNEL_OK")
</pallas_src>

<mosaic_0001>
module attributes {stable_mosaic.version = 11 : i64} {
  func.func @_msa_kernel(%arg0: i32, %arg1: memref<1x8x32xf32, #tpu.memory_space<vmem>>, %arg2: memref<1x8x32xf32, #tpu.memory_space<vmem>>, %arg3: memref<1x8x32xf32, #tpu.memory_space<vmem>>, %arg4: memref<1x8x32xf32, #tpu.memory_space<vmem>>) attributes {dimension_semantics = [#tpu.dimension_semantics<parallel>], iteration_bounds = array<i64: 2>, scalar_prefetch = 0 : i64, scratch_operands = 0 : i64, tpu.core_type = #tpu.core_type<tc>, window_params = [{transform_indices = @transform_0, window_bounds = array<i64: 1, 8, 32>}, {transform_indices = @transform_1, window_bounds = array<i64: 1, 8, 32>}, {transform_indices = @transform_2, window_bounds = array<i64: 1, 8, 32>}, {transform_indices = @transform_3, window_bounds = array<i64: 1, 8, 32>}]} {
    %c0 = arith.constant 0 : index
    %c0_0 = arith.constant 0 : index
    %c0_1 = arith.constant 0 : index
    %0 = vector.load %arg1[%c0, %c0_0, %c0_1] : memref<1x8x32xf32, #tpu.memory_space<vmem>>, vector<1x8x32xf32>
    %1 = vector.shape_cast %0 : vector<1x8x32xf32> to vector<8x32xf32>
    %c0_2 = arith.constant 0 : index
    %c0_3 = arith.constant 0 : index
    %c0_4 = arith.constant 0 : index
    %2 = vector.load %arg2[%c0_2, %c0_3, %c0_4] : memref<1x8x32xf32, #tpu.memory_space<vmem>>, vector<1x8x32xf32>
    %3 = vector.shape_cast %2 : vector<1x8x32xf32> to vector<8x32xf32>
    %c0_5 = arith.constant 0 : index
    %c0_6 = arith.constant 0 : index
    %c0_7 = arith.constant 0 : index
    %4 = vector.load %arg3[%c0_5, %c0_6, %c0_7] : memref<1x8x32xf32, #tpu.memory_space<vmem>>, vector<1x8x32xf32>
    %5 = vector.shape_cast %4 : vector<1x8x32xf32> to vector<8x32xf32>
    %6 = vector.extract_strided_slice %1 {offsets = [0, 0], sizes = [8, 4], strides = [1, 1]} : vector<8x32xf32> to vector<8x4xf32>
    %cst = arith.constant 5.000000e-01 : f32
    %7 = vector.broadcast %cst : f32 to vector<8x4xf32>
    %8 = arith.mulf %6, %7 : vector<8x4xf32>
    %9 = vector.extract_strided_slice %3 {offsets = [0, 0], sizes = [8, 4], strides = [1, 1]} : vector<8x32xf32> to vector<8x4xf32>
    %10 = vector.extract_strided_slice %5 {offsets = [0, 0], sizes = [8, 4], strides = [1, 1]} : vector<8x32xf32> to vector<8x4xf32>
    %cst_8 = arith.constant dense<0.000000e+00> : vector<8x8xf32>
    %11 = tpu.matmul %8, %9, %cst_8 {dimension_numbers = #tpu.dot_dimension_numbers<[1], [1], [0], [0], [0, 0, 1, 0], [], []>} : vector<8x4xf32>, vector<8x4xf32>, vector<8x8xf32> -> vector<8x8xf32>
    %cst_9 = arith.constant dense<0xFF800000> : vector<8xf32>
    %12 = vector.multi_reduction <maximumf>, %11, %cst_9 [1] : vector<8x8xf32> to vector<8xf32>
    %13 = vector.shape_cast %12 : vector<8xf32> to vector<8x1xf32>
    %14 = vector.broadcast %13 : vector<8x1xf32> to vector<8x8xf32>
    %15 = arith.subf %11, %14 : vector<8x8xf32>
    %16 = math.exp %15 : vector<8x8xf32>
    %cst_10 = arith.constant dense<0.000000e+00> : vector<8xf32>
    %17 = vector.multi_reduction <add>, %16, %cst_10 [1] : vector<8x8xf32> to vector<8xf32>
    %18 = vector.shape_cast %17 : vector<8xf32> to vector<8x1xf32>
    %19 = tpu.reciprocal %18 {approx = true} : vector<8x1xf32> -> vector<8x1xf32>
    %20 = vector.broadcast %19 : vector<8x1xf32> to vector<8x8xf32>
    %21 = arith.mulf %16, %20 : vector<8x8xf32>
    %cst_11 = arith.constant dense<0.000000e+00> : vector<8x4xf32>
    %22 = tpu.matmul %21, %10, %cst_11 {dimension_numbers = #tpu.dot_dimension_numbers<[1], [0], [0], [1], [0, 0, 1, 1], [], []>} : vector<8x8xf32>, vector<8x4xf32>, vector<8x4xf32> -> vector<8x4xf32>
    %23 = vector.extract_strided_slice %1 {offsets = [0, 4], sizes = [8, 4], strides = [1, 1]} : vector<8x32xf32> to vector<8x4xf32>
    %cst_12 = arith.constant 5.000000e-01 : f32
    %24 = vector.broadcast %cst_12 : f32 to vector<8x4xf32>
    %25 = arith.mulf %23, %24 : vector<8x4xf32>
    %26 = vector.extract_strided_slice %3 {offsets = [0, 4], sizes = [8, 4], strides = [1, 1]} : vector<8x32xf32> to vector<8x4xf32>
    %27 = vector.extract_strided_slice %5 {offsets = [0, 4], sizes = [8, 4], strides = [1, 1]} : vector<8x32xf32> to vector<8x4xf32>
    %cst_13 = arith.constant dense<0.000000e+00> : vector<8x8xf32>
    %28 = tpu.matmul %25, %26, %cst_13 {dimension_numbers = #tpu.dot_dimension_numbers<[1], [1], [0], [0], [0, 0, 1, 0], [], []>} : vector<8x4xf32>, vector<8x4xf32>, vector<8x8xf32> -> vector<8x8xf32>
    %cst_14 = arith.constant dense<0xFF800000> : vector<8xf32>
    %29 = vector.multi_reduction <maximumf>, %28, %cst_14 [1] : vector<8x8xf32> to vector<8xf32>
    %30 = vector.shape_cast %29 : vector<8xf32> to vector<8x1xf32>
    %31 = vector.broadcast %30 : vector<8x1xf32> to vector<8x8xf32>
    %32 = arith.subf %28, %31 : vector<8x8xf32>
    %33 = math.exp %32 : vector<8x8xf32>
    %cst_15 = arith.constant dense<0.000000e+00> : vector<8xf32>
    %34 = vector.multi_reduction <add>, %33, %cst_15 [1] : vector<8x8xf32> to vector<8xf32>
    %35 = vector.shape_cast %34 : vector<8xf32> to vector<8x1xf32>
    %36 = tpu.reciprocal %35 {approx = true} : vector<8x1xf32> -> vector<8x1xf32>
    %37 = vector.broadcast %36 : vector<8x1xf32> to vector<8x8xf32>
    %38 = arith.mulf %33, %37 : vector<8x8xf32>
    %cst_16 = arith.constant dense<0.000000e+00> : vector<8x4xf32>
    %39 = tpu.matmul %38, %27, %cst_16 {dimension_numbers = #tpu.dot_dimension_numbers<[1], [0], [0], [1], [0, 0, 1, 1], [], []>} : vector<8x8xf32>, vector<8x4xf32>, vector<8x4xf32> -> vector<8x4xf32>
    %40 = vector.extract_strided_slice %1 {offsets = [0, 8], sizes = [8, 4], strides = [1, 1]} : vector<8x32xf32> to vector<8x4xf32>
    %cst_17 = arith.constant 5.000000e-01 : f32
    %41 = vector.broadcast %cst_17 : f32 to vector<8x4xf32>
    %42 = arith.mulf %40, %41 : vector<8x4xf32>
    %43 = vector.extract_strided_slice %3 {offsets = [0, 8], sizes = [8, 4], strides = [1, 1]} : vector<8x32xf32> to vector<8x4xf32>
    %44 = vector.extract_strided_slice %5 {offsets = [0, 8], sizes = [8, 4], strides = [1, 1]} : vector<8x32xf32> to vector<8x4xf32>
    %cst_18 = arith.constant dense<0.000000e+00> : vector<8x8xf32>
    %45 = tpu.matmul %42, %43, %cst_18 {dimension_numbers = #tpu.dot_dimension_numbers<[1], [1], [0], [0], [0, 0, 1, 0], [], []>} : vector<8x4xf32>, vector<8x4xf32>, vector<8x8xf32> -> vector<8x8xf32>
    %cst_19 = arith.constant dense<0xFF800000> : vector<8xf32>
    %46 = vector.multi_reduction <maximumf>, %45, %cst_19 [1] : vector<8x8xf32> to vector<8xf32>
    %47 = vector.shape_cast %46 : vector<8xf32> to vector<8x1xf32>
    %48 = vector.broadcast %47 : vector<8x1xf32> to vector<8x8xf32>
    %49 = arith.subf %45, %48 : vector<8x8xf32>
    %50 = math.exp %49 : vector<8x8xf32>
    %cst_20 = arith.constant dense<0.000000e+00> : vector<8xf32>
    %51 = vector.multi_reduction <add>, %50, %cst_20 [1] : vector<8x8xf32> to vector<8xf32>
    %52 = vector.shape_cast %51 : vector<8xf32> to vector<8x1xf32>
    %53 = tpu.reciprocal %52 {approx = true} : vector<8x1xf32> -> vector<8x1xf32>
    %54 = vector.broadcast %53 : vector<8x1xf32> to vector<8x8xf32>
    %55 = arith.mulf %50, %54 : vector<8x8xf32>
    %cst_21 = arith.constant dense<0.000000e+00> : vector<8x4xf32>
    %56 = tpu.matmul %55, %44, %cst_21 {dimension_numbers = #tpu.dot_dimension_numbers<[1], [0], [0], [1], [0, 0, 1, 1], [], []>} : vector<8x8xf32>, vector<8x4xf32>, vector<8x4xf32> -> vector<8x4xf32>
    %57 = vector.extract_strided_slice %1 {offsets = [0, 12], sizes = [8, 4], strides = [1, 1]} : vector<8x32xf32> to vector<8x4xf32>
    %cst_22 = arith.constant 5.000000e-01 : f32
    %58 = vector.broadcast %cst_22 : f32 to vector<8x4xf32>
    %59 = arith.mulf %57, %58 : vector<8x4xf32>
    %60 = vector.extract_strided_slice %3 {offsets = [0, 12], sizes = [8, 4], strides = [1, 1]} : vector<8x32xf32> to vector<8x4xf32>
    %61 = vector.extract_strided_slice %5 {offsets = [0, 12], sizes = [8, 4], strides = [1, 1]} : vector<8x32xf32> to vector<8x4xf32>
    %cst_23 = arith.constant dense<0.000000e+00> : vector<8x8xf32>
    %62 = tpu.matmul %59, %60, %cst_23 {dimension_numbers = #tpu.dot_dimension_numbers<[1], [1], [0], [0], [0, 0, 1, 0], [], []>} : vector<8x4xf32>, vector<8x4xf32>, vector<8x8xf32> -> vector<8x8xf32>
    %cst_24 = arith.constant dense<0xFF800000> : vector<8xf32>
    %63 = vector.multi_reduction <maximumf>, %62, %cst_24 [1] : vector<8x8xf32> to vector<8xf32>
    %64 = vector.shape_cast %63 : vector<8xf32> to vector<8x1xf32>
    %65 = vector.broadcast %64 : vector<8x1xf32> to vector<8x8xf32>
    %66 = arith.subf %62, %65 : vector<8x8xf32>
    %67 = math.exp %66 : vector<8x8xf32>
    %cst_25 = arith.constant dense<0.000000e+00> : vector<8xf32>
    %68 = vector.multi_reduction <add>, %67, %cst_25 [1] : vector<8x8xf32> to vector<8xf32>
    %69 = vector.shape_cast %68 : vector<8xf32> to vector<8x1xf32>
    %70 = tpu.reciprocal %69 {approx = true} : vector<8x1xf32> -> vector<8x1xf32>
    %71 = vector.broadcast %70 : vector<8x1xf32> to vector<8x8xf32>
    %72 = arith.mulf %67, %71 : vector<8x8xf32>
    %cst_26 = arith.constant dense<0.000000e+00> : vector<8x4xf32>
    %73 = tpu.matmul %72, %61, %cst_26 {dimension_numbers = #tpu.dot_dimension_numbers<[1], [0], [0], [1], [0, 0, 1, 1], [], []>} : vector<8x8xf32>, vector<8x4xf32>, vector<8x4xf32> -> vector<8x4xf32>
    %74 = vector.extract_strided_slice %1 {offsets = [0, 16], sizes = [8, 4], strides = [1, 1]} : vector<8x32xf32> to vector<8x4xf32>
    %cst_27 = arith.constant 5.000000e-01 : f32
    %75 = vector.broadcast %cst_27 : f32 to vector<8x4xf32>
    %76 = arith.mulf %74, %75 : vector<8x4xf32>
    %77 = vector.extract_strided_slice %3 {offsets = [0, 16], sizes = [8, 4], strides = [1, 1]} : vector<8x32xf32> to vector<8x4xf32>
    %78 = vector.extract_strided_slice %5 {offsets = [0, 16], sizes = [8, 4], strides = [1, 1]} : vector<8x32xf32> to vector<8x4xf32>
    %cst_28 = arith.constant dense<0.000000e+00> : vector<8x8xf32>
    %79 = tpu.matmul %76, %77, %cst_28 {dimension_numbers = #tpu.dot_dimension_numbers<[1], [1], [0], [0], [0, 0, 1, 0], [], []>} : vector<8x4xf32>, vector<8x4xf32>, vector<8x8xf32> -> vector<8x8xf32>
    %cst_29 = arith.constant dense<0xFF800000> : vector<8xf32>
    %80 = vector.multi_reduction <maximumf>, %79, %cst_29 [1] : vector<8x8xf32> to vector<8xf32>
    %81 = vector.shape_cast %80 : vector<8xf32> to vector<8x1xf32>
    %82 = vector.broadcast %81 : vector<8x1xf32> to vector<8x8xf32>
    %83 = arith.subf %79, %82 : vector<8x8xf32>
    %84 = math.exp %83 : vector<8x8xf32>
    %cst_30 = arith.constant dense<0.000000e+00> : vector<8xf32>
    %85 = vector.multi_reduction <add>, %84, %cst_30 [1] : vector<8x8xf32> to vector<8xf32>
    %86 = vector.shape_cast %85 : vector<8xf32> to vector<8x1xf32>
    %87 = tpu.reciprocal %86 {approx = true} : vector<8x1xf32> -> vector<8x1xf32>
    %88 = vector.broadcast %87 : vector<8x1xf32> to vector<8x8xf32>
    %89 = arith.mulf %84, %88 : vector<8x8xf32>
    %cst_31 = arith.constant dense<0.000000e+00> : vector<8x4xf32>
    %90 = tpu.matmul %89, %78, %cst_31 {dimension_numbers = #tpu.dot_dimension_numbers<[1], [0], [0], [1], [0, 0, 1, 1], [], []>} : vector<8x8xf32>, vector<8x4xf32>, vector<8x4xf32> -> vector<8x4xf32>
    %91 = vector.extract_strided_slice %1 {offsets = [0, 20], sizes = [8, 4], strides = [1, 1]} : vector<8x32xf32> to vector<8x4xf32>
    %cst_32 = arith.constant 5.000000e-01 : f32
    %92 = vector.broadcast %cst_32 : f32 to vector<8x4xf32>
    %93 = arith.mulf %91, %92 : vector<8x4xf32>
    %94 = vector.extract_strided_slice %3 {offsets = [0, 20], sizes = [8, 4], strides = [1, 1]} : vector<8x32xf32> to vector<8x4xf32>
    %95 = vector.extract_strided_slice %5 {offsets = [0, 20], sizes = [8, 4], strides = [1, 1]} : vector<8x32xf32> to vector<8x4xf32>
    %cst_33 = arith.constant dense<0.000000e+00> : vector<8x8xf32>
    %96 = tpu.matmul %93, %94, %cst_33 {dimension_numbers = #tpu.dot_dimension_numbers<[1], [1], [0], [0], [0, 0, 1, 0], [], []>} : vector<8x4xf32>, vector<8x4xf32>, vector<8x8xf32> -> vector<8x8xf32>
    %cst_34 = arith.constant dense<0xFF800000> : vector<8xf32>
    %97 = vector.multi_reduction <maximumf>, %96, %cst_34 [1] : vector<8x8xf32> to vector<8xf32>
    %98 = vector.shape_cast %97 : vector<8xf32> to vector<8x1xf32>
    %99 = vector.broadcast %98 : vector<8x1xf32> to vector<8x8xf32>
    %100 = arith.subf %96, %99 : vector<8x8xf32>
    %101 = math.exp %100 : vector<8x8xf32>
    %cst_35 = arith.constant dense<0.000000e+00> : vector<8xf32>
    %102 = vector.multi_reduction <add>, %101, %cst_35 [1] : vector<8x8xf32> to vector<8xf32>
    %103 = vector.shape_cast %102 : vector<8xf32> to vector<8x1xf32>
    %104 = tpu.reciprocal %103 {approx = true} : vector<8x1xf32> -> vector<8x1xf32>
    %105 = vector.broadcast %104 : vector<8x1xf32> to vector<8x8xf32>
    %106 = arith.mulf %101, %105 : vector<8x8xf32>
    %cst_36 = arith.constant dense<0.000000e+00> : vector<8x4xf32>
    %107 = tpu.matmul %106, %95, %cst_36 {dimension_numbers = #tpu.dot_dimension_numbers<[1], [0], [0], [1], [0, 0, 1, 1], [], []>} : vector<8x8xf32>, vector<8x4xf32>, vector<8x4xf32> -> vector<8x4xf32>
    %108 = vector.extract_strided_slice %1 {offsets = [0, 24], sizes = [8, 4], strides = [1, 1]} : vector<8x32xf32> to vector<8x4xf32>
    %cst_37 = arith.constant 5.000000e-01 : f32
    %109 = vector.broadcast %cst_37 : f32 to vector<8x4xf32>
    %110 = arith.mulf %108, %109 : vector<8x4xf32>
    %111 = vector.extract_strided_slice %3 {offsets = [0, 24], sizes = [8, 4], strides = [1, 1]} : vector<8x32xf32> to vector<8x4xf32>
    %112 = vector.extract_strided_slice %5 {offsets = [0, 24], sizes = [8, 4], strides = [1, 1]} : vector<8x32xf32> to vector<8x4xf32>
    %cst_38 = arith.constant dense<0.000000e+00> : vector<8x8xf32>
    %113 = tpu.matmul %110, %111, %cst_38 {dimension_numbers = #tpu.dot_dimension_numbers<[1], [1], [0], [0], [0, 0, 1, 0], [], []>} : vector<8x4xf32>, vector<8x4xf32>, vector<8x8xf32> -> vector<8x8xf32>
    %cst_39 = arith.constant dense<0xFF800000> : vector<8xf32>
    %114 = vector.multi_reduction <maximumf>, %113, %cst_39 [1] : vector<8x8xf32> to vector<8xf32>
    %115 = vector.shape_cast %114 : vector<8xf32> to vector<8x1xf32>
    %116 = vector.broadcast %115 : vector<8x1xf32> to vector<8x8xf32>
    %117 = arith.subf %113, %116 : vector<8x8xf32>
    %118 = math.exp %117 : vector<8x8xf32>
    %cst_40 = arith.constant dense<0.000000e+00> : vector<8xf32>
    %119 = vector.multi_reduction <add>, %118, %cst_40 [1] : vector<8x8xf32> to vector<8xf32>
    %120 = vector.shape_cast %119 : vector<8xf32> to vector<8x1xf32>
    %121 = tpu.reciprocal %120 {approx = true} : vector<8x1xf32> -> vector<8x1xf32>
    %122 = vector.broadcast %121 : vector<8x1xf32> to vector<8x8xf32>
    %123 = arith.mulf %118, %122 : vector<8x8xf32>
    %cst_41 = arith.constant dense<0.000000e+00> : vector<8x4xf32>
    %124 = tpu.matmul %123, %112, %cst_41 {dimension_numbers = #tpu.dot_dimension_numbers<[1], [0], [0], [1], [0, 0, 1, 1], [], []>} : vector<8x8xf32>, vector<8x4xf32>, vector<8x4xf32> -> vector<8x4xf32>
    %125 = vector.extract_strided_slice %1 {offsets = [0, 28], sizes = [8, 4], strides = [1, 1]} : vector<8x32xf32> to vector<8x4xf32>
    %cst_42 = arith.constant 5.000000e-01 : f32
    %126 = vector.broadcast %cst_42 : f32 to vector<8x4xf32>
    %127 = arith.mulf %125, %126 : vector<8x4xf32>
    %128 = vector.extract_strided_slice %3 {offsets = [0, 28], sizes = [8, 4], strides = [1, 1]} : vector<8x32xf32> to vector<8x4xf32>
    %129 = vector.extract_strided_slice %5 {offsets = [0, 28], sizes = [8, 4], strides = [1, 1]} : vector<8x32xf32> to vector<8x4xf32>
    %cst_43 = arith.constant dense<0.000000e+00> : vector<8x8xf32>
    %130 = tpu.matmul %127, %128, %cst_43 {dimension_numbers = #tpu.dot_dimension_numbers<[1], [1], [0], [0], [0, 0, 1, 0], [], []>} : vector<8x4xf32>, vector<8x4xf32>, vector<8x8xf32> -> vector<8x8xf32>
    %cst_44 = arith.constant dense<0xFF800000> : vector<8xf32>
    %131 = vector.multi_reduction <maximumf>, %130, %cst_44 [1] : vector<8x8xf32> to vector<8xf32>
    %132 = vector.shape_cast %131 : vector<8xf32> to vector<8x1xf32>
    %133 = vector.broadcast %132 : vector<8x1xf32> to vector<8x8xf32>
    %134 = arith.subf %130, %133 : vector<8x8xf32>
    %135 = math.exp %134 : vector<8x8xf32>
    %cst_45 = arith.constant dense<0.000000e+00> : vector<8xf32>
    %136 = vector.multi_reduction <add>, %135, %cst_45 [1] : vector<8x8xf32> to vector<8xf32>
    %137 = vector.shape_cast %136 : vector<8xf32> to vector<8x1xf32>
    %138 = tpu.reciprocal %137 {approx = true} : vector<8x1xf32> -> vector<8x1xf32>
    %139 = vector.broadcast %138 : vector<8x1xf32> to vector<8x8xf32>
    %140 = arith.mulf %135, %139 : vector<8x8xf32>
    %cst_46 = arith.constant dense<0.000000e+00> : vector<8x4xf32>
    %141 = tpu.matmul %140, %129, %cst_46 {dimension_numbers = #tpu.dot_dimension_numbers<[1], [0], [0], [1], [0, 0, 1, 1], [], []>} : vector<8x8xf32>, vector<8x4xf32>, vector<8x4xf32> -> vector<8x4xf32>
    %142 = tpu.concatenate %22, %39, %56, %73, %90, %107, %124, %141 in 1 : vector<8x4xf32>, vector<8x4xf32>, vector<8x4xf32>, vector<8x4xf32>, vector<8x4xf32>, vector<8x4xf32>, vector<8x4xf32>, vector<8x4xf32> -> vector<8x32xf32>
    %c0_47 = arith.constant 0 : index
    %c0_48 = arith.constant 0 : index
    %c0_49 = arith.constant 0 : index
    %143 = vector.load %arg4[%c0_47, %c0_48, %c0_49] : memref<1x8x32xf32, #tpu.memory_space<vmem>>, vector<1x8x32xf32>
    %144 = vector.shape_cast %143 : vector<1x8x32xf32> to vector<8x32xf32>
    %145 = vector.shape_cast %142 : vector<8x32xf32> to vector<1x8x32xf32>
    tpu.vector_store %arg4[%c0_47, %c0_48, %c0_49], %145 {strides = array<i32>} : memref<1x8x32xf32, #tpu.memory_space<vmem>>, vector<1x8x32xf32>,
    return
  }
  func.func @transform_0(%arg0: i32) -> (i32, i32, i32) {
    %c0_i32 = arith.constant 0 : i32
    %c0_i32_0 = arith.constant 0 : i32
    %c0_i32_1 = arith.constant 0 : i32
    return %arg0, %c0_i32, %c0_i32_0 : i32, i32, i32
  }
  func.func @transform_1(%arg0: i32) -> (i32, i32, i32) {
    %c0_i32 = arith.constant 0 : i32
    %c0_i32_0 = arith.constant 0 : i32
    %c0_i32_1 = arith.constant 0 : i32
    return %arg0, %c0_i32, %c0_i32_0 : i32, i32, i32
  }
  func.func @transform_2(%arg0: i32) -> (i32, i32, i32) {
    %c0_i32 = arith.constant 0 : i32
    %c0_i32_0 = arith.constant 0 : i32
    %c0_i32_1 = arith.constant 0 : i32
    return %arg0, %c0_i32, %c0_i32_0 : i32, i32, i32
  }
  func.func @transform_3(%arg0: i32) -> (i32, i32, i32) {
    %c0_i32 = arith.constant 0 : i32
    %c0_i32_0 = arith.constant 0 : i32
    %c0_i32_1 = arith.constant 0 : i32
    return %arg0, %c0_i32, %c0_i32_0 : i32, i32, i32
  }
}

</mosaic_0001>

<llo_original>
// kernel: tpu_custom_call.1
$region0: #{tpu_custom_call.1}
  #allocation0 [shape = 'u32[]', space=smem, size = 0x4, offset = 0x4, fixed_abs, tag = 'smem constant byte address 0x4 - core index']
  #allocation1 [shape = 'u32[144,128]{1,0:T(1,128)}', space=vmem, size = 0x12000, scoped, tag = 'internal scratch']
  %s0 = inlined_call_operand.hbm [shape: f32[2,8,32], index: 0, kind: input, shape index: {}]
  %s1 = inlined_call_operand.hbm [shape: f32[2,8,32], index: 1, kind: input, shape index: {}]
  %s2 = inlined_call_operand.hbm [shape: f32[2,8,32], index: 2, kind: input, shape index: {}]
  %s3 = inlined_call_operand.hbm [shape: f32[2,8,32], index: 3, kind: output, shape index: {}]
  %s4 = sld [smem:[#allocation0]]
  $region57: #{tpu_custom_call.1} parent=0
    _
  %s6 = ssub.s32 1, %s4
  %s7 = scalar_select 0, %s6, %s4
  $region1: #{tpu_custom_call.1} parent=0
    #allocation2 [shape = 'u8[8192]{0}', space=vmem, size = 0x2000, scoped, tag = 'input window, operand 0']
    #allocation3 [shape = 's32[2]{0}', space=sflag, size = 0x8, scoped, tag = 'scoped memory for tpu_custom_call.1']
    #allocation4 [shape = 's32[2]{0}', space=sflag, size = 0x8, scoped, tag = 'scoped memory for tpu_custom_call.1']
    #allocation5 [shape = 'u8[8192]{0}', space=vmem, size = 0x2000, scoped, tag = 'input window, operand 1']
    #allocation6 [shape = 's32[2]{0}', space=sflag, size = 0x8, scoped, tag = 'scoped memory for tpu_custom_call.1']
    #allocation7 [shape = 'u8[8192]{0}', space=vmem, size = 0x2000, scoped, tag = 'input window, operand 2']
    #allocation8 [shape = 'u8[8192]{0}', space=vmem, size = 0x2000, scoped, tag = 'output window, operand 0']
    %8 = vsyncpa [#allocation3], 0
    %s9 = scalar_lea.sflag [#allocation3], 1
    %10 = vsyncpa %s9, 0
    %11 = vsyncpa [#allocation6], 0
    %s12 = scalar_lea.sflag [#allocation6], 1
    %13 = vsyncpa %s12, 0
    %14 = vsyncpa [#allocation4], 0
    %s15 = scalar_lea.sflag [#allocation4], 1
    %16 = vsyncpa %s15, 0
    loop: start=0, step=1, limit=4
    $region2: #{tpu_custom_call.1} parent=1 // loop_pre_header
      _
    $region3: #{tpu_custom_call.1} parent=1 // loop_header
      %s18 = sphi 0, %s22
      %p19 = scmp.ge.s32.totalorder %s18, 4
      %s28 = sphi 0, %s30
      %s31 = sphi 0, %s28
      %s32 = sphi 0, %s31
      %s48 = sphi 0, %s32
      %s54 = sphi 0, %s56
      %s57 = sphi 0, %s54
      %s58 = sphi 0, %s57
      %s74 = sphi 0, %s58
      %s80 = sphi 0, %s82
      %s83 = sphi 0, %s80
      %s84 = sphi 0, %s83
      %s100 = sphi 0, %s84
      %s106 = sphi 0, %s108
      %s109 = sphi 0, %s106
      %s110 = sphi 0, %s109
      %s126 = sphi 0, %s110
    $region4: #{tpu_custom_call.1} parent=1 // loop_header_branch
      %21 = sbr.rel (%p19) target = $region8
    $region5: #{tpu_custom_call.1} parent=1 // loop_body
      %s23 = ssub.s32 %s18, 1
      %s24 = ssub.s32 %s18, 2
      %s25 = sadd.s32 %s18, 1
      %s26 = ssub.s32 %s18, %s25
      %p27 = scmp.eq.s32.totalorder %s26, 0
      %s29 = sadd.s32 %s28, 1
      %s30 = scalar_select %p27, %s28, %s29
      %p33 = pneg %p27
      %p34 = scmp.eq.s32.totalorder %s18, 1
      %p35 = por %p33, %p34
      %p36 = scmp.ne.s32.totalorder %s28, %s31
      %p37 = scmp.eq.s32.totalorder %s18, 0
      %p38 = por %p36, %p37
      %p39 = scmp.ne.s32.totalorder %s28, %s31
      %p40 = scmp.eq.s32.totalorder %s23, 1
      %p41 = por %p39, %p40
      %p42 = scmp.ne.s32.totalorder %s31, %s32
      %p43 = scmp.eq.s32.totalorder %s23, 0
      %p44 = por %p42, %p43
      %p45 = scmp.ne.s32.totalorder %s31, %s32
      %p46 = scmp.eq.s32.totalorder %s24, 1
      %p47 = por %p45, %p46
      %p49 = scmp.ne.s32.totalorder %s32, %s48
      %p50 = scmp.eq.s32.totalorder %s24, 0
      %p51 = por %p49, %p50
      %s52 = ssub.s32 %s18, %s25
      %p53 = scmp.eq.s32.totalorder %s52, 0
      %s55 = sadd.s32 %s54, 1
      %s56 = scalar_select %p53, %s54, %s55
      %p59 = pneg %p53
      %p60 = scmp.eq.s32.totalorder %s18, 1
      %p61 = por %p59, %p60
      %p62 = scmp.ne.s32.totalorder %s54, %s57
      %p63 = scmp.eq.s32.totalorder %s18, 0
      %p64 = por %p62, %p63
      %p65 = scmp.ne.s32.totalorder %s54, %s57
      %p66 = scmp.eq.s32.totalorder %s23, 1
      %p67 = por %p65, %p66
      %p68 = scmp.ne.s32.totalorder %s57, %s58
      %p69 = scmp.eq.s32.totalorder %s23, 0
      %p70 = por %p68, %p69
      %p71 = scmp.ne.s32.totalorder %s57, %s58
      %p72 = scmp.eq.s32.totalorder %s24, 1
      %p73 = por %p71, %p72
      %p75 = scmp.ne.s32.totalorder %s58, %s74
      %p76 = scmp.eq.s32.totalorder %s24, 0
      %p77 = por %p75, %p76
      %s78 = ssub.s32 %s18, %s25
      %p79 = scmp.eq.s32.totalorder %s78, 0
      %s81 = sadd.s32 %s80, 1
      %s82 = scalar_select %p79, %s80, %s81
      %p85 = pneg %p79
      %p86 = scmp.eq.s32.totalorder %s18, 1
      %p87 = por %p85, %p86
      %p88 = scmp.ne.s32.totalorder %s80, %s83
      %p89 = scmp.eq.s32.totalorder %s18, 0
      %p90 = por %p88, %p89
      %p91 = scmp.ne.s32.totalorder %s80, %s83
      %p92 = scmp.eq.s32.totalorder %s23, 1
      %p93 = por %p91, %p92
      %p94 = scmp.ne.s32.totalorder %s83, %s84
      %p95 = scmp.eq.s32.totalorder %s23, 0
      %p96 = por %p94, %p95
      %p97 = scmp.ne.s32.totalorder %s83, %s84
      %p98 = scmp.eq.s32.totalorder %s24, 1
      %p99 = por %p97, %p98
      %p101 = scmp.ne.s32.totalorder %s84, %s100
      %p102 = scmp.eq.s32.totalorder %s24, 0
      %p103 = por %p101, %p102
      %s104 = ssub.s32 %s18, %s25
      %p105 = scmp.eq.s32.totalorder %s104, 0
      %s107 = sadd.s32 %s106, 1
      %s108 = scalar_select %p105, %s106, %s107
      %p111 = pneg %p105
      %p112 = scmp.eq.s32.totalorder %s18, 1
      %p113 = por %p111, %p112
      %p114 = scmp.ne.s32.totalorder %s106, %s109
      %p115 = scmp.eq.s32.totalorder %s18, 0
      %p116 = por %p114, %p115
      %p117 = scmp.ne.s32.totalorder %s106, %s109
      %p118 = scmp.eq.s32.totalorder %s23, 1
      %p119 = por %p117, %p118
      %p120 = scmp.ne.s32.totalorder %s109, %s110
      %p121 = scmp.eq.s32.totalorder %s23, 0
      %p122 = por %p120, %p121
      %p123 = scmp.ne.s32.totalorder %s109, %s110
      %p124 = scmp.eq.s32.totalorder %s24, 1
      %p125 = por %p123, %p124
      %p127 = scmp.ne.s32.totalorder %s110, %s126
      %p128 = scmp.eq.s32.totalorder %s24, 0
      %p129 = por %p127, %p128
      %p130 = scmp.le.s32.totalorder 1, %s18
      %p131 = scmp.lt.s32.totalorder %s18, 3
      %p132 = pnand %p130, %p131
      %p133 = pneg %p132
      // Predicated region
      $region9: #{tpu_custom_call.1} parent=5 // pred_check
        _
      $region10: #{tpu_custom_call.1} parent=5 // pred_check_branch
        %135 = sbr.rel (%p132) target = $region12
      $region11: #{tpu_custom_call.1} parent=5 // pred_region
        %s136 = ssub.s32 %s18, 1
      $region12: #{tpu_custom_call.1} parent=5 // pred_fallthru
        _
      %p137 = scmp.lt.s32.totalorder %s18, 2
      // Predicated region
      $region13: #{tpu_custom_call.1} parent=5 // pred_check
        %p138 = pneg %p137
      $region14: #{tpu_custom_call.1} parent=5 // pred_check_branch
        %140 = sbr.rel (%p138) target = $region16
      $region15: #{tpu_custom_call.1} parent=5 // pred_region
        // Predicated region
        $region17: #{tpu_custom_call.1} parent=15 // pred_check
          %p141 = pneg %p38
        $region18: #{tpu_custom_call.1} parent=15 // pred_check_branch
          %143 = sbr.rel (%p141) target = $region20
        $region19: #{tpu_custom_call.1} parent=15 // pred_region
          %s144 = sand.u32 %s28, 1
          %s145 = scalar_lea.sflag [#allocation3], %s144
          %s146 = sand.u32 %s28, 1
          %s147 = smul.addr %s146, 8
          %s148 = scalar_lea.vmem [#allocation2], %s147
          %s150 = ssub.s32 128, 128
          %151 = vsyncadd %s145, %s150
          %s152 = smul.addr %s18, 128
          %s153 = scalar_lea.hbm %s0, %s152
          %s155 = sshll.u32 %s148, 4
          %s156 = int_to_ptr.vmem [resolvable:$true] %s155
          %158 = dma.hbm_to_vmem [thread:$0]  %s153, 128, %s156, %s145
        $region20: #{tpu_custom_call.1} parent=15 // pred_fallthru
          _
        // Predicated region
        $region21: #{tpu_custom_call.1} parent=15 // pred_check
          %p159 = pneg %p64
        $region22: #{tpu_custom_call.1} parent=15 // pred_check_branch
          %161 = sbr.rel (%p159) target = $region24
        $region23: #{tpu_custom_call.1} parent=15 // pred_region
          %s162 = sand.u32 %s18, 1
          %s163 = scalar_lea.sflag [#allocation6], %s162
          %s164 = sand.u32 %s54, 1
          %s165 = smul.addr %s164, 8
          %s166 = scalar_lea.vmem [#allocation5], %s165
          %s168 = ssub.s32 128, 128
          %169 = vsyncadd %s163, %s168
          %s170 = smul.addr %s18, 128
          %s171 = scalar_lea.hbm %s1, %s170
          %s173 = sshll.u32 %s166, 4
          %s174 = int_to_ptr.vmem [resolvable:$true] %s173
          %176 = dma.hbm_to_vmem [thread:$0]  %s171, 128, %s174, %s163
        $region24: #{tpu_custom_call.1} parent=15 // pred_fallthru
          _
        // Predicated region
        $region25: #{tpu_custom_call.1} parent=15 // pred_check
          %p177 = pneg %p90
        $region26: #{tpu_custom_call.1} parent=15 // pred_check_branch
          %179 = sbr.rel (%p177) target = $region28
        $region27: #{tpu_custom_call.1} parent=15 // pred_region
          %s180 = sand.u32 %s18, 1
          %s181 = scalar_lea.sflag [#allocation6], %s180
          %s182 = sand.u32 %s80, 1
          %s183 = smul.addr %s182, 8
          %s184 = scalar_lea.vmem [#allocation7], %s183
          %s186 = ssub.s32 128, 128
          %187 = vsyncadd %s181, %s186
          %s188 = smul.addr %s18, 128
          %s189 = scalar_lea.hbm %s2, %s188
          %s191 = sshll.u32 %s184, 4
          %s192 = int_to_ptr.vmem [resolvable:$true] %s191
          %194 = dma.hbm_to_vmem [thread:$0]  %s189, 128, %s192, %s181
        $region28: #{tpu_custom_call.1} parent=15 // pred_fallthru
          _
      $region16: #{tpu_custom_call.1} parent=5 // pred_fallthru
        _
      %p195 = scmp.le.s32.totalorder 1, %s18
      %p196 = scmp.lt.s32.totalorder %s18, 3
      %p197 = pnand %p195, %p196
      %p198 = pneg %p197
      // Predicated region
      $region29: #{tpu_custom_call.1} parent=5 // pred_check
        _
      $region30: #{tpu_custom_call.1} parent=5 // pred_check_branch
        %200 = sbr.rel (%p197) target = $region32
      $region31: #{tpu_custom_call.1} parent=5 // pred_region
        %s201 = ssub.s32 %s18, 1
        %s202 = sand.u32 %s31, 1
        %s203 = scalar_lea.sflag [#allocation3], %s202
        %s204 = sand.u32 %s31, 1
        %s205 = smul.addr %s204, 8
        %s206 = scalar_lea.vmem [#allocation2], %s205
        // Predicated region
        $region33: #{tpu_custom_call.1} parent=31 // pred_check
          %p207 = pneg %p44
        $region34: #{tpu_custom_call.1} parent=31 // pred_check_branch
          %209 = sbr.rel (%p207) target = $region36
        $region35: #{tpu_custom_call.1} parent=31 // pred_region
          %210 = dma.done %s203, 128
        $region36: #{tpu_custom_call.1} parent=31 // pred_fallthru
          _
        %s211 = sand.u32 %s23, 1
        %s212 = scalar_lea.sflag [#allocation6], %s211
        %s213 = sand.u32 %s57, 1
        %s214 = smul.addr %s213, 8
        %s215 = scalar_lea.vmem [#allocation5], %s214
        // Predicated region
        $region37: #{tpu_custom_call.1} parent=31 // pred_check
          %p216 = pneg %p70
        $region38: #{tpu_custom_call.1} parent=31 // pred_check_branch
          %218 = sbr.rel (%p216) target = $region40
        $region39: #{tpu_custom_call.1} parent=31 // pred_region
          %219 = dma.done %s212, 128
        $region40: #{tpu_custom_call.1} parent=31 // pred_fallthru
          _
        %s220 = sand.u32 %s23, 1
        %s221 = scalar_lea.sflag [#allocation6], %s220
        %s222 = sand.u32 %s83, 1
        %s223 = smul.addr %s222, 8
        %s224 = scalar_lea.vmem [#allocation7], %s223
        // Predicated region
        $region41: #{tpu_custom_call.1} parent=31 // pred_check
          %p225 = pneg %p96
        $region42: #{tpu_custom_call.1} parent=31 // pred_check_branch
          %227 = sbr.rel (%p225) target = $region44
        $region43: #{tpu_custom_call.1} parent=31 // pred_region
          %228 = dma.done %s221, 128
        $region44: #{tpu_custom_call.1} parent=31 // pred_fallthru
          _
        %s229 = sand.u32 %s31, 1
        %s230 = scalar_lea.sflag [#allocation3], %s229
        %s231 = sand.u32 %s31, 1
        %s232 = smul.addr %s231, 8
        %s233 = scalar_lea.vmem [#allocation2], %s232
        %p234 = pneg %p44
        %p235 = pneg %p41
        %s236 = sand.u32 %s23, 1
        %s237 = scalar_lea.sflag [#allocation6], %s236
        %s238 = sand.u32 %s57, 1
        %s239 = smul.addr %s238, 8
        %s240 = scalar_lea.vmem [#allocation5], %s239
        %p241 = pneg %p70
        %p242 = pneg %p67
        %s243 = sand.u32 %s23, 1
        %s244 = scalar_lea.sflag [#allocation6], %s243
        %s245 = sand.u32 %s83, 1
        %s246 = smul.addr %s245, 8
        %s247 = scalar_lea.vmem [#allocation7], %s246
        %p248 = pneg %p96
        %p249 = pneg %p93
        %p250 = pneg %p122
        %p251 = pneg %p119
        %s252 = sand.u32 %s109, 1
        %s253 = scalar_lea.sflag [#allocation4], %s252
        %s254 = sand.u32 %s109, 1
        %s255 = smul.addr %s254, 8
        %s256 = scalar_lea.vmem [#allocation8], %s255
        %v257 = vld [vmem:[%s206] sm:$0xff]
        %v258 = vld [vmem:[%s215] sm:$0xff]
        %v259 = vld [vmem:[%s224] sm:$0xff]
        %v260 = vmul.f32 %v257, 0.5
        %vm261 = vcmask 31744
        %v263 = vsel %vm261, %v260, 0
        %v266 = vsel %vm261, %v258, 0
        %268 = vmatprep.subr.mxu0 0.0
        %269 = vmatpush1.xpose.msra.mxu0 %v266
        %270 = vmatprep.subr.mxu0 0.0
        %271 = vmatpush1.xpose.msra.mxu0 0.0
        %272 = vmatprep.subr.mxu0 0.0
        %273 = vmatpush1.xpose.msra.mxu0 0.0
        %274 = vmatprep.subr.mxu0 0.0
        %275 = vmatpush1.xpose.msra.mxu0 0.0
        %276 = vmatprep.subr.mxu0 0.0
        %277 = vmatpush1.xpose.msra.mxu0 0.0
        %278 = vmatprep.subr.mxu0 0.0
        %279 = vmatpush1.xpose.msra.mxu0 0.0
        %280 = vmatprep.subr.mxu0 0.0
        %281 = vmatpush1.xpose.msra.mxu0 0.0
        %282 = vmatprep.subr.mxu0 0.0
        %283 = vmatpush1.xpose.msra.mxu0 0.0
        %284 = vmatprep.subr.mxu0 0.0
        %285 = vmatpush1.xpose.msra.mxu0 0.0
        %286 = vmatprep.subr.mxu0 0.0
        %287 = vmatpush1.xpose.msra.mxu0 0.0
        %288 = vmatprep.subr.mxu0 0.0
        %289 = vmatpush1.xpose.msra.mxu0 0.0
        %290 = vmatprep.subr.mxu0 0.0
        %291 = vmatpush1.xpose.msra.mxu0 0.0
        %292 = vmatprep.subr.mxu0 0.0
        %293 = vmatpush1.xpose.msra.mxu0 0.0
        %294 = vmatprep.subr.mxu0 0.0
        %295 = vmatpush1.xpose.msra.mxu0 0.0
        %296 = vmatprep.subr.mxu0 0.0
        %297 = vmatpush1.xpose.msra.mxu0 0.0
        %298 = vmatprep.subr.mxu0 0.0
        %299 = vmatpush1.xpose.msra.mxu0 0.0
        %300 = vmatprep.subr.mxu0 0.0
        %301 = vmatpush1.xpose.msra.mxu0 0.0
        %302 = vmatprep.subr.mxu0 0.0
        %303 = vmatpush1.xpose.msra.mxu0 0.0
        %304 = vmatprep.subr.mxu0 0.0
        %305 = vmatpush1.xpose.msra.mxu0 0.0
        %306 = vmatprep.subr.mxu0 0.0
        %307 = vmatpush1.xpose.msra.mxu0 0.0
        %308 = vmatprep.subr.mxu0 0.0
        %309 = vmatpush1.xpose.msra.mxu0 0.0
        %310 = vmatprep.subr.mxu0 0.0
        %311 = vmatpush1.xpose.msra.mxu0 0.0
        %312 = vmatprep.subr.mxu0 0.0
        %313 = vmatpush1.xpose.msra.mxu0 0.0
        %314 = vmatprep.subr.mxu0 0.0
        %315 = vmatpush1.xpose.msra.mxu0 0.0
        %316 = vmatprep.subr.mxu0 0.0
        %317 = vmatpush1.xpose.msra.mxu0 0.0
        %318 = vmatprep.subr.mxu0 0.0
        %319 = vmatpush1.xpose.msra.mxu0 0.0
        %320 = vmatprep.subr.mxu0 0.0
        %321 = vmatpush1.xpose.msra.mxu0 0.0
        %322 = vmatprep.subr.mxu0 0.0
        %323 = vmatpush1.xpose.msra.mxu0 0.0
        %324 = vmatprep.subr.mxu0 0.0
        %325 = vmatpush1.xpose.msra.mxu0 0.0
        %326 = vmatprep.subr.mxu0 0.0
        %327 = vmatpush1.xpose.msra.mxu0 0.0
        %328 = vmatprep.subr.mxu0 0.0
        %329 = vmatpush1.xpose.msra.mxu0 0.0
        %330 = vmatprep.subr.mxu0 0.0
        %331 = vmatpush1.xpose.msra.mxu0 0.0
        %332 = vmatprep.mubr.f32.mxu0 0.0
        %333 = vmatmul.mubr.f32.gmra.mrb[0].mxu0 %v263
        %v334 = vpop.f32.mrb[0].mxu0
        %v335 = vadd.f32 0.0, %v334
        %v336 = vpop.f32.mrb[0].mxu0
        %337 = vdwg.mxu0
        %vm338 = vcmask 64512
        %v339 = vsel %vm338, %v335, -inf
        %340 = vmax.xlane.f32.xlu0 %v339
        %v341 = vpop.xlane.xlu0 %340
        %v342 = vsub.f32 %v335, %v341
        %v343 = vmul.f32 %v342, 1.442695
        %v344 = vpow.pop %v343
        %v345 = vsel %vm338, %v344, 0.0
        %346 = vadd.xlane.f32.xlu0 %v345
        %v347 = vpop.xlane.xlu0 %346
        %v348 = vrcp.pop %v347
        %v349 = vmul.f32 %v344, %v348
        %v351 = vsel %vm338, %v349, 0
        %353 = vmatprep.subr.mxu0 0.0
        %354 = vmatpush1.msra.mxu0 %v259
        %355 = vmatprep.subr.mxu0 0.0
        %356 = vmatpush1.msra.mxu0 0.0
        %357 = vmatprep.subr.mxu0 0.0
        %358 = vmatpush1.msra.mxu0 0.0
        %359 = vmatprep.subr.mxu0 0.0
        %360 = vmatpush1.msra.mxu0 0.0
        %361 = vmatprep.subr.mxu0 0.0
        %362 = vmatpush1.msra.mxu0 0.0
        %363 = vmatprep.subr.mxu0 0.0
        %364 = vmatpush1.msra.mxu0 0.0
        %365 = vmatprep.subr.mxu0 0.0
        %366 = vmatpush1.msra.mxu0 0.0
        %367 = vmatprep.subr.mxu0 0.0
        %368 = vmatpush1.msra.mxu0 0.0
        %369 = vmatprep.subr.mxu0 0.0
        %370 = vmatpush1.msra.mxu0 0.0
        %371 = vmatprep.subr.mxu0 0.0
        %372 = vmatpush1.msra.mxu0 0.0
        %373 = vmatprep.subr.mxu0 0.0
        %374 = vmatpush1.msra.mxu0 0.0
        %375 = vmatprep.subr.mxu0 0.0
        %376 = vmatpush1.msra.mxu0 0.0
        %377 = vmatprep.subr.mxu0 0.0
        %378 = vmatpush1.msra.mxu0 0.0
        %379 = vmatprep.subr.mxu0 0.0
        %380 = vmatpush1.msra.mxu0 0.0
        %381 = vmatprep.subr.mxu0 0.0
        %382 = vmatpush1.msra.mxu0 0.0
        %383 = vmatprep.subr.mxu0 0.0
        %384 = vmatpush1.msra.mxu0 0.0
        %385 = vmatprep.subr.mxu0 0.0
        %386 = vmatpush1.msra.mxu0 0.0
        %387 = vmatprep.subr.mxu0 0.0
        %388 = vmatpush1.msra.mxu0 0.0
        %389 = vmatprep.subr.mxu0 0.0
        %390 = vmatpush1.msra.mxu0 0.0
        %391 = vmatprep.subr.mxu0 0.0
        %392 = vmatpush1.msra.mxu0 0.0
        %393 = vmatprep.subr.mxu0 0.0
        %394 = vmatpush1.msra.mxu0 0.0
        %395 = vmatprep.subr.mxu0 0.0
        %396 = vmatpush1.msra.mxu0 0.0
        %397 = vmatprep.subr.mxu0 0.0
        %398 = vmatpush1.msra.mxu0 0.0
        %399 = vmatprep.subr.mxu0 0.0
        %400 = vmatpush1.msra.mxu0 0.0
        %401 = vmatprep.subr.mxu0 0.0
        %402 = vmatpush1.msra.mxu0 0.0
        %403 = vmatprep.subr.mxu0 0.0
        %404 = vmatpush1.msra.mxu0 0.0
        %405 = vmatprep.subr.mxu0 0.0
        %406 = vmatpush1.msra.mxu0 0.0
        %407 = vmatprep.subr.mxu0 0.0
        %408 = vmatpush1.msra.mxu0 0.0
        %409 = vmatprep.subr.mxu0 0.0
        %410 = vmatpush1.msra.mxu0 0.0
        %411 = vmatprep.subr.mxu0 0.0
        %412 = vmatpush1.msra.mxu0 0.0
        %413 = vmatprep.subr.mxu0 0.0
        %414 = vmatpush1.msra.mxu0 0.0
        %415 = vmatprep.subr.mxu0 0.0
        %416 = vmatpush1.msra.mxu0 0.0
        %417 = vmatprep.mubr.f32.mxu0 0.0
        %418 = vmatmul.mubr.f32.gmra.mrb[0].mxu0 %v351
        %v419 = vpop.f32.mrb[0].mxu0
        %v420 = vadd.f32 0.0, %v419
        %v421 = vpop.f32.mrb[0].mxu0
        %422 = vdwg.mxu0
        %423 = vrot.lane.b32.xlu0 %v260, 124
        %v424 = vpop.permute.xlu0 %423
        %425 = vrot.lane.b32.xlu0 %v258, 124
        %v426 = vpop.permute.xlu0 %425
        %v427 = vsel %vm261, %v424, 0
        %v429 = vsel %vm261, %v426, 0
        %431 = vmatprep.subr.mxu0 0.0
        %432 = vmatpush1.xpose.msra.mxu0 %v429
        %433 = vmatprep.subr.mxu0 0.0
        %434 = vmatpush1.xpose.msra.mxu0 0.0
        %435 = vmatprep.subr.mxu0 0.0
        %436 = vmatpush1.xpose.msra.mxu0 0.0
        %437 = vmatprep.subr.mxu0 0.0
        %438 = vmatpush1.xpose.msra.mxu0 0.0
        %439 = vmatprep.subr.mxu0 0.0
        %440 = vmatpush1.xpose.msra.mxu0 0.0
        %441 = vmatprep.subr.mxu0 0.0
        %442 = vmatpush1.xpose.msra.mxu0 0.0
        %443 = vmatprep.subr.mxu0 0.0
        %444 = vmatpush1.xpose.msra.mxu0 0.0
        %445 = vmatprep.subr.mxu0 0.0
        %446 = vmatpush1.xpose.msra.mxu0 0.0
        %447 = vmatprep.subr.mxu0 0.0
        %448 = vmatpush1.xpose.msra.mxu0 0.0
        %449 = vmatprep.subr.mxu0 0.0
        %450 = vmatpush1.xpose.msra.mxu0 0.0
        %451 = vmatprep.subr.mxu0 0.0
        %452 = vmatpush1.xpose.msra.mxu0 0.0
        %453 = vmatprep.subr.mxu0 0.0
        %454 = vmatpush1.xpose.msra.mxu0 0.0
        %455 = vmatprep.subr.mxu0 0.0
        %456 = vmatpush1.xpose.msra.mxu0 0.0
        %457 = vmatprep.subr.mxu0 0.0
        %458 = vmatpush1.xpose.msra.mxu0 0.0
        %459 = vmatprep.subr.mxu0 0.0
        %460 = vmatpush1.xpose.msra.mxu0 0.0
        %461 = vmatprep.subr.mxu0 0.0
        %462 = vmatpush1.xpose.msra.mxu0 0.0
        %463 = vmatprep.subr.mxu0 0.0
        %464 = vmatpush1.xpose.msra.mxu0 0.0
        %465 = vmatprep.subr.mxu0 0.0
        %466 = vmatpush1.xpose.msra.mxu0 0.0
        %467 = vmatprep.subr.mxu0 0.0
        %468 = vmatpush1.xpose.msra.mxu0 0.0
        %469 = vmatprep.subr.mxu0 0.0
        %470 = vmatpush1.xpose.msra.mxu0 0.0
        %471 = vmatprep.subr.mxu0 0.0
        %472 = vmatpush1.xpose.msra.mxu0 0.0
        %473 = vmatprep.subr.mxu0 0.0
        %474 = vmatpush1.xpose.msra.mxu0 0.0
        %475 = vmatprep.subr.mxu0 0.0
        %476 = vmatpush1.xpose.msra.mxu0 0.0
        %477 = vmatprep.subr.mxu0 0.0
        %478 = vmatpush1.xpose.msra.mxu0 0.0
        %479 = vmatprep.subr.mxu0 0.0
        %480 = vmatpush1.xpose.msra.mxu0 0.0
        %481 = vmatprep.subr.mxu0 0.0
        %482 = vmatpush1.xpose.msra.mxu0 0.0
        %483 = vmatprep.subr.mxu0 0.0
        %484 = vmatpush1.xpose.msra.mxu0 0.0
        %485 = vmatprep.subr.mxu0 0.0
        %486 = vmatpush1.xpose.msra.mxu0 0.0
        %487 = vmatprep.subr.mxu0 0.0
        %488 = vmatpush1.xpose.msra.mxu0 0.0
        %489 = vmatprep.subr.mxu0 0.0
        %490 = vmatpush1.xpose.msra.mxu0 0.0
        %491 = vmatprep.subr.mxu0 0.0
        %492 = vmatpush1.xpose.msra.mxu0 0.0
        %493 = vmatprep.subr.mxu0 0.0
        %494 = vmatpush1.xpose.msra.mxu0 0.0
        %495 = vmatprep.mubr.f32.mxu0 0.0
        %496 = vmatmul.mubr.f32.gmra.mrb[0].mxu0 %v427
        %v497 = vpop.f32.mrb[0].mxu0
        %v498 = vadd.f32 0.0, %v497
        %v499 = vpop.f32.mrb[0].mxu0
        %500 = vdwg.mxu0
        %v501 = vsel %vm338, %v498, -inf
        %502 = vmax.xlane.f32.xlu0 %v501
        %v503 = vpop.xlane.xlu0 %502
        %v504 = vsub.f32 %v498, %v503
        %v505 = vmul.f32 %v504, 1.442695
        %v506 = vpow.pop %v505
        %v507 = vsel %vm338, %v506, 0.0
        %508 = vadd.xlane.f32.xlu0 %v507
        %v509 = vpop.xlane.xlu0 %508
        %v510 = vrcp.pop %v509
        %v511 = vmul.f32 %v506, %v510
        %513 = vrot.lane.b32.xlu0 %v259, 124
        %v514 = vpop.permute.xlu0 %513
        %v517 = vsel %vm338, %v511, 0
        %519 = vmatprep.subr.mxu0 0.0
        %520 = vmatpush1.msra.mxu0 %v514
        %521 = vmatprep.subr.mxu0 0.0
        %522 = vmatpush1.msra.mxu0 0.0
        %523 = vmatprep.subr.mxu0 0.0
        %524 = vmatpush1.msra.mxu0 0.0
        %525 = vmatprep.subr.mxu0 0.0
        %526 = vmatpush1.msra.mxu0 0.0
        %527 = vmatprep.subr.mxu0 0.0
        %528 = vmatpush1.msra.mxu0 0.0
        %529 = vmatprep.subr.mxu0 0.0
        %530 = vmatpush1.msra.mxu0 0.0
        %531 = vmatprep.subr.mxu0 0.0
        %532 = vmatpush1.msra.mxu0 0.0
        %533 = vmatprep.subr.mxu0 0.0
        %534 = vmatpush1.msra.mxu0 0.0
        %535 = vmatprep.subr.mxu0 0.0
        %536 = vmatpush1.msra.mxu0 0.0
        %537 = vmatprep.subr.mxu0 0.0
        %538 = vmatpush1.msra.mxu0 0.0
        %539 = vmatprep.subr.mxu0 0.0
        %540 = vmatpush1.msra.mxu0 0.0
        %541 = vmatprep.subr.mxu0 0.0
        %542 = vmatpush1.msra.mxu0 0.0
        %543 = vmatprep.subr.mxu0 0.0
        %544 = vmatpush1.msra.mxu0 0.0
        %545 = vmatprep.subr.mxu0 0.0
        %546 = vmatpush1.msra.mxu0 0.0
        %547 = vmatprep.subr.mxu0 0.0
        %548 = vmatpush1.msra.mxu0 0.0
        %549 = vmatprep.subr.mxu0 0.0
        %550 = vmatpush1.msra.mxu0 0.0
        %551 = vmatprep.subr.mxu0 0.0
        %552 = vmatpush1.msra.mxu0 0.0
        %553 = vmatprep.subr.mxu0 0.0
        %554 = vmatpush1.msra.mxu0 0.0
        %555 = vmatprep.subr.mxu0 0.0
        %556 = vmatpush1.msra.mxu0 0.0
        %557 = vmatprep.subr.mxu0 0.0
        %558 = vmatpush1.msra.mxu0 0.0
        %559 = vmatprep.subr.mxu0 0.0
        %560 = vmatpush1.msra.mxu0 0.0
        %561 = vmatprep.subr.mxu0 0.0
        %562 = vmatpush1.msra.mxu0 0.0
        %563 = vmatprep.subr.mxu0 0.0
        %564 = vmatpush1.msra.mxu0 0.0
        %565 = vmatprep.subr.mxu0 0.0
        %566 = vmatpush1.msra.mxu0 0.0
        %567 = vmatprep.subr.mxu0 0.0
        %568 = vmatpush1.msra.mxu0 0.0
        %569 = vmatprep.subr.mxu0 0.0
        %570 = vmatpush1.msra.mxu0 0.0
        %571 = vmatprep.subr.mxu0 0.0
        %572 = vmatpush1.msra.mxu0 0.0
        %573 = vmatprep.subr.mxu0 0.0
        %574 = vmatpush1.msra.mxu0 0.0
        %575 = vmatprep.subr.mxu0 0.0
        %576 = vmatpush1.msra.mxu0 0.0
        %577 = vmatprep.subr.mxu0 0.0
        %578 = vmatpush1.msra.mxu0 0.0
        %579 = vmatprep.subr.mxu0 0.0
        %580 = vmatpush1.msra.mxu0 0.0
        %581 = vmatprep.subr.mxu0 0.0
        %582 = vmatpush1.msra.mxu0 0.0
        %583 = vmatprep.mubr.f32.mxu0 0.0
        %584 = vmatmul.mubr.f32.gmra.mrb[0].mxu0 %v517
        %v585 = vpop.f32.mrb[0].mxu0
        %v586 = vadd.f32 0.0, %v585
        %v587 = vpop.f32.mrb[0].mxu0
        %588 = vdwg.mxu0
        %589 = vrot.lane.b32.xlu0 %v260, 120
        %v590 = vpop.permute.xlu0 %589
        %591 = vrot.lane.b32.xlu0 %v258, 120
        %v592 = vpop.permute.xlu0 %591
        %v593 = vsel %vm261, %v590, 0
        %v595 = vsel %vm261, %v592, 0
        %597 = vmatprep.subr.mxu0 0.0
        %598 = vmatpush1.xpose.msra.mxu0 %v595
        %599 = vmatprep.subr.mxu0 0.0
        %600 = vmatpush1.xpose.msra.mxu0 0.0
        %601 = vmatprep.subr.mxu0 0.0
        %602 = vmatpush1.xpose.msra.mxu0 0.0
        %603 = vmatprep.subr.mxu0 0.0
        %604 = vmatpush1.xpose.msra.mxu0 0.0
        %605 = vmatprep.subr.mxu0 0.0
        %606 = vmatpush1.xpose.msra.mxu0 0.0
        %607 = vmatprep.subr.mxu0 0.0
        %608 = vmatpush1.xpose.msra.mxu0 0.0
        %609 = vmatprep.subr.mxu0 0.0
        %610 = vmatpush1.xpose.msra.mxu0 0.0
        %611 = vmatprep.subr.mxu0 0.0
        %612 = vmatpush1.xpose.msra.mxu0 0.0
        %613 = vmatprep.subr.mxu0 0.0
        %614 = vmatpush1.xpose.msra.mxu0 0.0
        %615 = vmatprep.subr.mxu0 0.0
        %616 = vmatpush1.xpose.msra.mxu0 0.0
        %617 = vmatprep.subr.mxu0 0.0
        %618 = vmatpush1.xpose.msra.mxu0 0.0
        %619 = vmatprep.subr.mxu0 0.0
        %620 = vmatpush1.xpose.msra.mxu0 0.0
        %621 = vmatprep.subr.mxu0 0.0
        %622 = vmatpush1.xpose.msra.mxu0 0.0
        %623 = vmatprep.subr.mxu0 0.0
        %624 = vmatpush1.xpose.msra.mxu0 0.0
        %625 = vmatprep.subr.mxu0 0.0
        %626 = vmatpush1.xpose.msra.mxu0 0.0
        %627 = vmatprep.subr.mxu0 0.0
        %628 = vmatpush1.xpose.msra.mxu0 0.0
        %629 = vmatprep.subr.mxu0 0.0
        %630 = vmatpush1.xpose.msra.mxu0 0.0
        %631 = vmatprep.subr.mxu0 0.0
        %632 = vmatpush1.xpose.msra.mxu0 0.0
        %633 = vmatprep.subr.mxu0 0.0
        %634 = vmatpush1.xpose.msra.mxu0 0.0
        %635 = vmatprep.subr.mxu0 0.0
        %636 = vmatpush1.xpose.msra.mxu0 0.0
        %637 = vmatprep.subr.mxu0 0.0
        %638 = vmatpush1.xpose.msra.mxu0 0.0
        %639 = vmatprep.subr.mxu0 0.0
        %640 = vmatpush1.xpose.msra.mxu0 0.0
        %641 = vmatprep.subr.mxu0 0.0
        %642 = vmatpush1.xpose.msra.mxu0 0.0
        %643 = vmatprep.subr.mxu0 0.0
        %644 = vmatpush1.xpose.msra.mxu0 0.0
        %645 = vmatprep.subr.mxu0 0.0
        %646 = vmatpush1.xpose.msra.mxu0 0.0
        %647 = vmatprep.subr.mxu0 0.0
        %648 = vmatpush1.xpose.msra.mxu0 0.0
        %649 = vmatprep.subr.mxu0 0.0
        %650 = vmatpush1.xpose.msra.mxu0 0.0
        %651 = vmatprep.subr.mxu0 0.0
        %652 = vmatpush1.xpose.msra.mxu0 0.0
        %653 = vmatprep.subr.mxu0 0.0
        %654 = vmatpush1.xpose.msra.mxu0 0.0
        %655 = vmatprep.subr.mxu0 0.0
        %656 = vmatpush1.xpose.msra.mxu0 0.0
        %657 = vmatprep.subr.mxu0 0.0
        %658 = vmatpush1.xpose.msra.mxu0 0.0
        %659 = vmatprep.subr.mxu0 0.0
        %660 = vmatpush1.xpose.msra.mxu0 0.0
        %661 = vmatprep.mubr.f32.mxu0 0.0
        %662 = vmatmul.mubr.f32.gmra.mrb[0].mxu0 %v593
        %v663 = vpop.f32.mrb[0].mxu0
        %v664 = vadd.f32 0.0, %v663
        %v665 = vpop.f32.mrb[0].mxu0
        %666 = vdwg.mxu0
        %v667 = vsel %vm338, %v664, -inf
        %668 = vmax.xlane.f32.xlu0 %v667
        %v669 = vpop.xlane.xlu0 %668
        %v670 = vsub.f32 %v664, %v669
        %v671 = vmul.f32 %v670, 1.442695
        %v672 = vpow.pop %v671
        %v673 = vsel %vm338, %v672, 0.0
        %674 = vadd.xlane.f32.xlu0 %v673
        %v675 = vpop.xlane.xlu0 %674
        %v676 = vrcp.pop %v675
        %v677 = vmul.f32 %v672, %v676
        %678 = vrot.lane.b32.xlu0 %v259, 120
        %v679 = vpop.permute.xlu0 %678
        %v682 = vsel %vm338, %v677, 0
        %684 = vmatprep.subr.mxu0 0.0
        %685 = vmatpush1.msra.mxu0 %v679
        %686 = vmatprep.subr.mxu0 0.0
        %687 = vmatpush1.msra.mxu0 0.0
        %688 = vmatprep.subr.mxu0 0.0
        %689 = vmatpush1.msra.mxu0 0.0
        %690 = vmatprep.subr.mxu0 0.0
        %691 = vmatpush1.msra.mxu0 0.0
        %692 = vmatprep.subr.mxu0 0.0
        %693 = vmatpush1.msra.mxu0 0.0
        %694 = vmatprep.subr.mxu0 0.0
        %695 = vmatpush1.msra.mxu0 0.0
        %696 = vmatprep.subr.mxu0 0.0
        %697 = vmatpush1.msra.mxu0 0.0
        %698 = vmatprep.subr.mxu0 0.0
        %699 = vmatpush1.msra.mxu0 0.0
        %700 = vmatprep.subr.mxu0 0.0
        %701 = vmatpush1.msra.mxu0 0.0
        %702 = vmatprep.subr.mxu0 0.0
        %703 = vmatpush1.msra.mxu0 0.0
        %704 = vmatprep.subr.mxu0 0.0
        %705 = vmatpush1.msra.mxu0 0.0
        %706 = vmatprep.subr.mxu0 0.0
        %707 = vmatpush1.msra.mxu0 0.0
        %708 = vmatprep.subr.mxu0 0.0
        %709 = vmatpush1.msra.mxu0 0.0
        %710 = vmatprep.subr.mxu0 0.0
        %711 = vmatpush1.msra.mxu0 0.0
        %712 = vmatprep.subr.mxu0 0.0
        %713 = vmatpush1.msra.mxu0 0.0
        %714 = vmatprep.subr.mxu0 0.0
        %715 = vmatpush1.msra.mxu0 0.0
        %716 = vmatprep.subr.mxu0 0.0
        %717 = vmatpush1.msra.mxu0 0.0
        %718 = vmatprep.subr.mxu0 0.0
        %719 = vmatpush1.msra.mxu0 0.0
        %720 = vmatprep.subr.mxu0 0.0
        %721 = vmatpush1.msra.mxu0 0.0
        %722 = vmatprep.subr.mxu0 0.0
        %723 = vmatpush1.msra.mxu0 0.0
        %724 = vmatprep.subr.mxu0 0.0
        %725 = vmatpush1.msra.mxu0 0.0
        %726 = vmatprep.subr.mxu0 0.0
        %727 = vmatpush1.msra.mxu0 0.0
        %728 = vmatprep.subr.mxu0 0.0
        %729 = vmatpush1.msra.mxu0 0.0
        %730 = vmatprep.subr.mxu0 0.0
        %731 = vmatpush1.msra.mxu0 0.0
        %732 = vmatprep.subr.mxu0 0.0
        %733 = vmatpush1.msra.mxu0 0.0
        %734 = vmatprep.subr.mxu0 0.0
        %735 = vmatpush1.msra.mxu0 0.0
        %736 = vmatprep.subr.mxu0 0.0
        %737 = vmatpush1.msra.mxu0 0.0
        %738 = vmatprep.subr.mxu0 0.0
        %739 = vmatpush1.msra.mxu0 0.0
        %740 = vmatprep.subr.mxu0 0.0
        %741 = vmatpush1.msra.mxu0 0.0
        %742 = vmatprep.subr.mxu0 0.0
        %743 = vmatpush1.msra.mxu0 0.0
        %744 = vmatprep.subr.mxu0 0.0
        %745 = vmatpush1.msra.mxu0 0.0
        %746 = vmatprep.subr.mxu0 0.0
        %747 = vmatpush1.msra.mxu0 0.0
        %748 = vmatprep.mubr.f32.mxu0 0.0
        %749 = vmatmul.mubr.f32.gmra.mrb[0].mxu0 %v682
        %v750 = vpop.f32.mrb[0].mxu0
        %v751 = vadd.f32 0.0, %v750
        %v752 = vpop.f32.mrb[0].mxu0
        %753 = vdwg.mxu0
        %754 = vrot.lane.b32.xlu0 %v260, 116
        %v755 = vpop.permute.xlu0 %754
        %756 = vrot.lane.b32.xlu0 %v258, 116
        %v757 = vpop.permute.xlu0 %756
        %v758 = vsel %vm261, %v755, 0
        %v760 = vsel %vm261, %v757, 0
        %762 = vmatprep.subr.mxu0 0.0
        %763 = vmatpush1.xpose.msra.mxu0 %v760
        %764 = vmatprep.subr.mxu0 0.0
        %765 = vmatpush1.xpose.msra.mxu0 0.0
        %766 = vmatprep.subr.mxu0 0.0
        %767 = vmatpush1.xpose.msra.mxu0 0.0
        %768 = vmatprep.subr.mxu0 0.0
        %769 = vmatpush1.xpose.msra.mxu0 0.0
        %770 = vmatprep.subr.mxu0 0.0
        %771 = vmatpush1.xpose.msra.mxu0 0.0
        %772 = vmatprep.subr.mxu0 0.0
        %773 = vmatpush1.xpose.msra.mxu0 0.0
        %774 = vmatprep.subr.mxu0 0.0
        %775 = vmatpush1.xpose.msra.mxu0 0.0
        %776 = vmatprep.subr.mxu0 0.0
        %777 = vmatpush1.xpose.msra.mxu0 0.0
        %778 = vmatprep.subr.mxu0 0.0
        %779 = vmatpush1.xpose.msra.mxu0 0.0
        %780 = vmatprep.subr.mxu0 0.0
        %781 = vmatpush1.xpose.msra.mxu0 0.0
        %782 = vmatprep.subr.mxu0 0.0
        %783 = vmatpush1.xpose.msra.mxu0 0.0
        %784 = vmatprep.subr.mxu0 0.0
        %785 = vmatpush1.xpose.msra.mxu0 0.0
        %786 = vmatprep.subr.mxu0 0.0
        %787 = vmatpush1.xpose.msra.mxu0 0.0
        %788 = vmatprep.subr.mxu0 0.0
        %789 = vmatpush1.xpose.msra.mxu0 0.0
        %790 = vmatprep.subr.mxu0 0.0
        %791 = vmatpush1.xpose.msra.mxu0 0.0
        %792 = vmatprep.subr.mxu0 0.0
        %793 = vmatpush1.xpose.msra.mxu0 0.0
        %794 = vmatprep.subr.mxu0 0.0
        %795 = vmatpush1.xpose.msra.mxu0 0.0
        %796 = vmatprep.subr.mxu0 0.0
        %797 = vmatpush1.xpose.msra.mxu0 0.0
        %798 = vmatprep.subr.mxu0 0.0
        %799 = vmatpush1.xpose.msra.mxu0 0.0
        %800 = vmatprep.subr.mxu0 0.0
        %801 = vmatpush1.xpose.msra.mxu0 0.0
        %802 = vmatprep.subr.mxu0 0.0
        %803 = vmatpush1.xpose.msra.mxu0 0.0
        %804 = vmatprep.subr.mxu0 0.0
        %805 = vmatpush1.xpose.msra.mxu0 0.0
        %806 = vmatprep.subr.mxu0 0.0
        %807 = vmatpush1.xpose.msra.mxu0 0.0
        %808 = vmatprep.subr.mxu0 0.0
        %809 = vmatpush1.xpose.msra.mxu0 0.0
        %810 = vmatprep.subr.mxu0 0.0
        %811 = vmatpush1.xpose.msra.mxu0 0.0
        %812 = vmatprep.subr.mxu0 0.0
        %813 = vmatpush1.xpose.msra.mxu0 0.0
        %814 = vmatprep.subr.mxu0 0.0
        %815 = vmatpush1.xpose.msra.mxu0 0.0
        %816 = vmatprep.subr.mxu0 0.0
        %817 = vmatpush1.xpose.msra.mxu0 0.0
        %818 = vmatprep.subr.mxu0 0.0
        %819 = vmatpush1.xpose.msra.mxu0 0.0
        %820 = vmatprep.subr.mxu0 0.0
        %821 = vmatpush1.xpose.msra.mxu0 0.0
        %822 = vmatprep.subr.mxu0 0.0
        %823 = vmatpush1.xpose.msra.mxu0 0.0
        %824 = vmatprep.subr.mxu0 0.0
        %825 = vmatpush1.xpose.msra.mxu0 0.0
        %826 = vmatprep.mubr.f32.mxu0 0.0
        %827 = vmatmul.mubr.f32.gmra.mrb[0].mxu0 %v758
        %v828 = vpop.f32.mrb[0].mxu0
        %v829 = vadd.f32 0.0, %v828
        %v830 = vpop.f32.mrb[0].mxu0
        %831 = vdwg.mxu0
        %v832 = vsel %vm338, %v829, -inf
        %833 = vmax.xlane.f32.xlu0 %v832
        %v834 = vpop.xlane.xlu0 %833
        %v835 = vsub.f32 %v829, %v834
        %v836 = vmul.f32 %v835, 1.442695
        %v837 = vpow.pop %v836
        %v838 = vsel %vm338, %v837, 0.0
        %839 = vadd.xlane.f32.xlu0 %v838
        %v840 = vpop.xlane.xlu0 %839
        %v841 = vrcp.pop %v840
        %v842 = vmul.f32 %v837, %v841
        %843 = vrot.lane.b32.xlu0 %v259, 116
        %v844 = vpop.permute.xlu0 %843
        %v847 = vsel %vm338, %v842, 0
        %849 = vmatprep.subr.mxu0 0.0
        %850 = vmatpush1.msra.mxu0 %v844
        %851 = vmatprep.subr.mxu0 0.0
        %852 = vmatpush1.msra.mxu0 0.0
        %853 = vmatprep.subr.mxu0 0.0
        %854 = vmatpush1.msra.mxu0 0.0
        %855 = vmatprep.subr.mxu0 0.0
        %856 = vmatpush1.msra.mxu0 0.0
        %857 = vmatprep.subr.mxu0 0.0
        %858 = vmatpush1.msra.mxu0 0.0
        %859 = vmatprep.subr.mxu0 0.0
        %860 = vmatpush1.msra.mxu0 0.0
        %861 = vmatprep.subr.mxu0 0.0
        %862 = vmatpush1.msra.mxu0 0.0
        %863 = vmatprep.subr.mxu0 0.0
        %864 = vmatpush1.msra.mxu0 0.0
        %865 = vmatprep.subr.mxu0 0.0
        %866 = vmatpush1.msra.mxu0 0.0
        %867 = vmatprep.subr.mxu0 0.0
        %868 = vmatpush1.msra.mxu0 0.0
        %869 = vmatprep.subr.mxu0 0.0
        %870 = vmatpush1.msra.mxu0 0.0
        %871 = vmatprep.subr.mxu0 0.0
        %872 = vmatpush1.msra.mxu0 0.0
        %873 = vmatprep.subr.mxu0 0.0
        %874 = vmatpush1.msra.mxu0 0.0
        %875 = vmatprep.subr.mxu0 0.0
        %876 = vmatpush1.msra.mxu0 0.0
        %877 = vmatprep.subr.mxu0 0.0
        %878 = vmatpush1.msra.mxu0 0.0
        %879 = vmatprep.subr.mxu0 0.0
        %880 = vmatpush1.msra.mxu0 0.0
        %881 = vmatprep.subr.mxu0 0.0
        %882 = vmatpush1.msra.mxu0 0.0
        %883 = vmatprep.subr.mxu0 0.0
        %884 = vmatpush1.msra.mxu0 0.0
        %885 = vmatprep.subr.mxu0 0.0
        %886 = vmatpush1.msra.mxu0 0.0
        %887 = vmatprep.subr.mxu0 0.0
        %888 = vmatpush1.msra.mxu0 0.0
        %889 = vmatprep.subr.mxu0 0.0
        %890 = vmatpush1.msra.mxu0 0.0
        %891 = vmatprep.subr.mxu0 0.0
        %892 = vmatpush1.msra.mxu0 0.0
        %893 = vmatprep.subr.mxu0 0.0
        %894 = vmatpush1.msra.mxu0 0.0
        %895 = vmatprep.subr.mxu0 0.0
        %896 = vmatpush1.msra.mxu0 0.0
        %897 = vmatprep.subr.mxu0 0.0
        %898 = vmatpush1.msra.mxu0 0.0
        %899 = vmatprep.subr.mxu0 0.0
        %900 = vmatpush1.msra.mxu0 0.0
        %901 = vmatprep.subr.mxu0 0.0
        %902 = vmatpush1.msra.mxu0 0.0
        %903 = vmatprep.subr.mxu0 0.0
        %904 = vmatpush1.msra.mxu0 0.0
        %905 = vmatprep.subr.mxu0 0.0
        %906 = vmatpush1.msra.mxu0 0.0
        %907 = vmatprep.subr.mxu0 0.0
        %908 = vmatpush1.msra.mxu0 0.0
        %909 = vmatprep.subr.mxu0 0.0
        %910 = vmatpush1.msra.mxu0 0.0
        %911 = vmatprep.subr.mxu0 0.0
        %912 = vmatpush1.msra.mxu0 0.0
        %913 = vmatprep.mubr.f32.mxu0 0.0
        %914 = vmatmul.mubr.f32.gmra.mrb[0].mxu0 %v847
        %v915 = vpop.f32.mrb[0].mxu0
        %v916 = vadd.f32 0.0, %v915
        %v917 = vpop.f32.mrb[0].mxu0
        %918 = vdwg.mxu0
        %919 = vrot.lane.b32.xlu0 %v260, 112
        %v920 = vpop.permute.xlu0 %919
        %921 = vrot.lane.b32.xlu0 %v258, 112
        %v922 = vpop.permute.xlu0 %921
        %v923 = vsel %vm261, %v920, 0
        %v925 = vsel %vm261, %v922, 0
        %927 = vmatprep.subr.mxu0 0.0
        %928 = vmatpush1.xpose.msra.mxu0 %v925
        %929 = vmatprep.subr.mxu0 0.0
        %930 = vmatpush1.xpose.msra.mxu0 0.0
        %931 = vmatprep.subr.mxu0 0.0
        %932 = vmatpush1.xpose.msra.mxu0 0.0
        %933 = vmatprep.subr.mxu0 0.0
        %934 = vmatpush1.xpose.msra.mxu0 0.0
        %935 = vmatprep.subr.mxu0 0.0
        %936 = vmatpush1.xpose.msra.mxu0 0.0
        %937 = vmatprep.subr.mxu0 0.0
        %938 = vmatpush1.xpose.msra.mxu0 0.0
        %939 = vmatprep.subr.mxu0 0.0
        %940 = vmatpush1.xpose.msra.mxu0 0.0
        %941 = vmatprep.subr.mxu0 0.0
        %942 = vmatpush1.xpose.msra.mxu0 0.0
        %943 = vmatprep.subr.mxu0 0.0
        %944 = vmatpush1.xpose.msra.mxu0 0.0
        %945 = vmatprep.subr.mxu0 0.0
        %946 = vmatpush1.xpose.msra.mxu0 0.0
        %947 = vmatprep.subr.mxu0 0.0
        %948 = vmatpush1.xpose.msra.mxu0 0.0
        %949 = vmatprep.subr.mxu0 0.0
        %950 = vmatpush1.xpose.msra.mxu0 0.0
        %951 = vmatprep.subr.mxu0 0.0
        %952 = vmatpush1.xpose.msra.mxu0 0.0
        %953 = vmatprep.subr.mxu0 0.0
        %954 = vmatpush1.xpose.msra.mxu0 0.0
        %955 = vmatprep.subr.mxu0 0.0
        %956 = vmatpush1.xpose.msra.mxu0 0.0
        %957 = vmatprep.subr.mxu0 0.0
        %958 = vmatpush1.xpose.msra.mxu0 0.0
        %959 = vmatprep.subr.mxu0 0.0
        %960 = vmatpush1.xpose.msra.mxu0 0.0
        %961 = vmatprep.subr.mxu0 0.0
        %962 = vmatpush1.xpose.msra.mxu0 0.0
        %963 = vmatprep.subr.mxu0 0.0
        %964 = vmatpush1.xpose.msra.mxu0 0.0
        %965 = vmatprep.subr.mxu0 0.0
        %966 = vmatpush1.xpose.msra.mxu0 0.0
        %967 = vmatprep.subr.mxu0 0.0
        %968 = vmatpush1.xpose.msra.mxu0 0.0
        %969 = vmatprep.subr.mxu0 0.0
        %970 = vmatpush1.xpose.msra.mxu0 0.0
        %971 = vmatprep.subr.mxu0 0.0
        %972 = vmatpush1.xpose.msra.mxu0 0.0
        %973 = vmatprep.subr.mxu0 0.0
        %974 = vmatpush1.xpose.msra.mxu0 0.0
        %975 = vmatprep.subr.mxu0 0.0
        %976 = vmatpush1.xpose.msra.mxu0 0.0
        %977 = vmatprep.subr.mxu0 0.0
        %978 = vmatpush1.xpose.msra.mxu0 0.0
        %979 = vmatprep.subr.mxu0 0.0
        %980 = vmatpush1.xpose.msra.mxu0 0.0
        %981 = vmatprep.subr.mxu0 0.0
        %982 = vmatpush1.xpose.msra.mxu0 0.0
        %983 = vmatprep.subr.mxu0 0.0
        %984 = vmatpush1.xpose.msra.mxu0 0.0
        %985 = vmatprep.subr.mxu0 0.0
        %986 = vmatpush1.xpose.msra.mxu0 0.0
        %987 = vmatprep.subr.mxu0 0.0
        %988 = vmatpush1.xpose.msra.mxu0 0.0
        %989 = vmatprep.subr.mxu0 0.0
        %990 = vmatpush1.xpose.msra.mxu0 0.0
        %991 = vmatprep.mubr.f32.mxu0 0.0
        %992 = vmatmul.mubr.f32.gmra.mrb[0].mxu0 %v923
        %v993 = vpop.f32.mrb[0].mxu0
        %v994 = vadd.f32 0.0, %v993
        %v995 = vpop.f32.mrb[0].mxu0
        %996 = vdwg.mxu0
        %v997 = vsel %vm338, %v994, -inf
        %998 = vmax.xlane.f32.xlu0 %v997
        %v999 = vpop.xlane.xlu0 %998
        %v1000 = vsub.f32 %v994, %v999
        %v1001 = vmul.f32 %v1000, 1.442695
        %v1002 = vpow.pop %v1001
        %v1003 = vsel %vm338, %v1002, 0.0
        %1004 = vadd.xlane.f32.xlu0 %v1003
        %v1005 = vpop.xlane.xlu0 %1004
        %v1006 = vrcp.pop %v1005
        %v1007 = vmul.f32 %v1002, %v1006
        %1008 = vrot.lane.b32.xlu0 %v259, 112
        %v1009 = vpop.permute.xlu0 %1008
        %v1012 = vsel %vm338, %v1007, 0
        %1014 = vmatprep.subr.mxu0 0.0
        %1015 = vmatpush1.msra.mxu0 %v1009
        %1016 = vmatprep.subr.mxu0 0.0
        %1017 = vmatpush1.msra.mxu0 0.0
        %1018 = vmatprep.subr.mxu0 0.0
        %1019 = vmatpush1.msra.mxu0 0.0
        %1020 = vmatprep.subr.mxu0 0.0
        %1021 = vmatpush1.msra.mxu0 0.0
        %1022 = vmatprep.subr.mxu0 0.0
        %1023 = vmatpush1.msra.mxu0 0.0
        %1024 = vmatprep.subr.mxu0 0.0
        %1025 = vmatpush1.msra.mxu0 0.0
        %1026 = vmatprep.subr.mxu0 0.0
        %1027 = vmatpush1.msra.mxu0 0.0
        %1028 = vmatprep.subr.mxu0 0.0
        %1029 = vmatpush1.msra.mxu0 0.0
        %1030 = vmatprep.subr.mxu0 0.0
        %1031 = vmatpush1.msra.mxu0 0.0
        %1032 = vmatprep.subr.mxu0 0.0
        %1033 = vmatpush1.msra.mxu0 0.0
        %1034 = vmatprep.subr.mxu0 0.0
        %1035 = vmatpush1.msra.mxu0 0.0
        %1036 = vmatprep.subr.mxu0 0.0
        %1037 = vmatpush1.msra.mxu0 0.0
        %1038 = vmatprep.subr.mxu0 0.0
        %1039 = vmatpush1.msra.mxu0 0.0
        %1040 = vmatprep.subr.mxu0 0.0
        %1041 = vmatpush1.msra.mxu0 0.0
        %1042 = vmatprep.subr.mxu0 0.0
        %1043 = vmatpush1.msra.mxu0 0.0
        %1044 = vmatprep.subr.mxu0 0.0
        %1045 = vmatpush1.msra.mxu0 0.0
        %1046 = vmatprep.subr.mxu0 0.0
        %1047 = vmatpush1.msra.mxu0 0.0
        %1048 = vmatprep.subr.mxu0 0.0
        %1049 = vmatpush1.msra.mxu0 0.0
        %1050 = vmatprep.subr.mxu0 0.0
        %1051 = vmatpush1.msra.mxu0 0.0
        %1052 = vmatprep.subr.mxu0 0.0
        %1053 = vmatpush1.msra.mxu0 0.0
        %1054 = vmatprep.subr.mxu0 0.0
        %1055 = vmatpush1.msra.mxu0 0.0
        %1056 = vmatprep.subr.mxu0 0.0
        %1057 = vmatpush1.msra.mxu0 0.0
        %1058 = vmatprep.subr.mxu0 0.0
        %1059 = vmatpush1.msra.mxu0 0.0
        %1060 = vmatprep.subr.mxu0 0.0
        %1061 = vmatpush1.msra.mxu0 0.0
        %1062 = vmatprep.subr.mxu0 0.0
        %1063 = vmatpush1.msra.mxu0 0.0
        %1064 = vmatprep.subr.mxu0 0.0
        %1065 = vmatpush1.msra.mxu0 0.0
        %1066 = vmatprep.subr.mxu0 0.0
        %1067 = vmatpush1.msra.mxu0 0.0
        %1068 = vmatprep.subr.mxu0 0.0
        %1069 = vmatpush1.msra.mxu0 0.0
        %1070 = vmatprep.subr.mxu0 0.0
        %1071 = vmatpush1.msra.mxu0 0.0
        %1072 = vmatprep.subr.mxu0 0.0
        %1073 = vmatpush1.msra.mxu0 0.0
        %1074 = vmatprep.subr.mxu0 0.0
        %1075 = vmatpush1.msra.mxu0 0.0
        %1076 = vmatprep.subr.mxu0 0.0
        %1077 = vmatpush1.msra.mxu0 0.0
        %1078 = vmatprep.mubr.f32.mxu0 0.0
        %1079 = vmatmul.mubr.f32.gmra.mrb[0].mxu0 %v1012
        %v1080 = vpop.f32.mrb[0].mxu0
        %v1081 = vadd.f32 0.0, %v1080
        %v1082 = vpop.f32.mrb[0].mxu0
        %1083 = vdwg.mxu0
        %1084 = vrot.lane.b32.xlu0 %v260, 108
        %v1085 = vpop.permute.xlu0 %1084
        %1086 = vrot.lane.b32.xlu0 %v258, 108
        %v1087 = vpop.permute.xlu0 %1086
        %v1088 = vsel %vm261, %v1085, 0
        %v1090 = vsel %vm261, %v1087, 0
        %1092 = vmatprep.subr.mxu0 0.0
        %1093 = vmatpush1.xpose.msra.mxu0 %v1090
        %1094 = vmatprep.subr.mxu0 0.0
        %1095 = vmatpush1.xpose.msra.mxu0 0.0
        %1096 = vmatprep.subr.mxu0 0.0
        %1097 = vmatpush1.xpose.msra.mxu0 0.0
        %1098 = vmatprep.subr.mxu0 0.0
        %1099 = vmatpush1.xpose.msra.mxu0 0.0
        %1100 = vmatprep.subr.mxu0 0.0
        %1101 = vmatpush1.xpose.msra.mxu0 0.0
        %1102 = vmatprep.subr.mxu0 0.0
        %1103 = vmatpush1.xpose.msra.mxu0 0.0
        %1104 = vmatprep.subr.mxu0 0.0
        %1105 = vmatpush1.xpose.msra.mxu0 0.0
        %1106 = vmatprep.subr.mxu0 0.0
        %1107 = vmatpush1.xpose.msra.mxu0 0.0
        %1108 = vmatprep.subr.mxu0 0.0
        %1109 = vmatpush1.xpose.msra.mxu0 0.0
        %1110 = vmatprep.subr.mxu0 0.0
        %1111 = vmatpush1.xpose.msra.mxu0 0.0
        %1112 = vmatprep.subr.mxu0 0.0
        %1113 = vmatpush1.xpose.msra.mxu0 0.0
        %1114 = vmatprep.subr.mxu0 0.0
        %1115 = vmatpush1.xpose.msra.mxu0 0.0
        %1116 = vmatprep.subr.mxu0 0.0
        %1117 = vmatpush1.xpose.msra.mxu0 0.0
        %1118 = vmatprep.subr.mxu0 0.0
        %1119 = vmatpush1.xpose.msra.mxu0 0.0
        %1120 = vmatprep.subr.mxu0 0.0
        %1121 = vmatpush1.xpose.msra.mxu0 0.0
        %1122 = vmatprep.subr.mxu0 0.0
        %1123 = vmatpush1.xpose.msra.mxu0 0.0
        %1124 = vmatprep.subr.mxu0 0.0
        %1125 = vmatpush1.xpose.msra.mxu0 0.0
        %1126 = vmatprep.subr.mxu0 0.0
        %1127 = vmatpush1.xpose.msra.mxu0 0.0
        %1128 = vmatprep.subr.mxu0 0.0
        %1129 = vmatpush1.xpose.msra.mxu0 0.0
        %1130 = vmatprep.subr.mxu0 0.0
        %1131 = vmatpush1.xpose.msra.mxu0 0.0
        %1132 = vmatprep.subr.mxu0 0.0
        %1133 = vmatpush1.xpose.msra.mxu0 0.0
        %1134 = vmatprep.subr.mxu0 0.0
        %1135 = vmatpush1.xpose.msra.mxu0 0.0
        %1136 = vmatprep.subr.mxu0 0.0
        %1137 = vmatpush1.xpose.msra.mxu0 0.0
        %1138 = vmatprep.subr.mxu0 0.0
        %1139 = vmatpush1.xpose.msra.mxu0 0.0
        %1140 = vmatprep.subr.mxu0 0.0
        %1141 = vmatpush1.xpose.msra.mxu0 0.0
        %1142 = vmatprep.subr.mxu0 0.0
        %1143 = vmatpush1.xpose.msra.mxu0 0.0
        %1144 = vmatprep.subr.mxu0 0.0
        %1145 = vmatpush1.xpose.msra.mxu0 0.0
        %1146 = vmatprep.subr.mxu0 0.0
        %1147 = vmatpush1.xpose.msra.mxu0 0.0
        %1148 = vmatprep.subr.mxu0 0.0
        %1149 = vmatpush1.xpose.msra.mxu0 0.0
        %1150 = vmatprep.subr.mxu0 0.0
        %1151 = vmatpush1.xpose.msra.mxu0 0.0
        %1152 = vmatprep.subr.mxu0 0.0
        %1153 = vmatpush1.xpose.msra.mxu0 0.0
        %1154 = vmatprep.subr.mxu0 0.0
        %1155 = vmatpush1.xpose.msra.mxu0 0.0
        %1156 = vmatprep.mubr.f32.mxu0 0.0
        %1157 = vmatmul.mubr.f32.gmra.mrb[0].mxu0 %v1088
        %v1158 = vpop.f32.mrb[0].mxu0
        %v1159 = vadd.f32 0.0, %v1158
        %v1160 = vpop.f32.mrb[0].mxu0
        %1161 = vdwg.mxu0
        %v1162 = vsel %vm338, %v1159, -inf
        %1163 = vmax.xlane.f32.xlu0 %v1162
        %v1164 = vpop.xlane.xlu0 %1163
        %v1165 = vsub.f32 %v1159, %v1164
        %v1166 = vmul.f32 %v1165, 1.442695
        %v1167 = vpow.pop %v1166
        %v1168 = vsel %vm338, %v1167, 0.0
        %1169 = vadd.xlane.f32.xlu0 %v1168
        %v1170 = vpop.xlane.xlu0 %1169
        %v1171 = vrcp.pop %v1170
        %v1172 = vmul.f32 %v1167, %v1171
        %1173 = vrot.lane.b32.xlu0 %v259, 108
        %v1174 = vpop.permute.xlu0 %1173
        %v1177 = vsel %vm338, %v1172, 0
        %1179 = vmatprep.subr.mxu0 0.0
        %1180 = vmatpush1.msra.mxu0 %v1174
        %1181 = vmatprep.subr.mxu0 0.0
        %1182 = vmatpush1.msra.mxu0 0.0
        %1183 = vmatprep.subr.mxu0 0.0
        %1184 = vmatpush1.msra.mxu0 0.0
        %1185 = vmatprep.subr.mxu0 0.0
        %1186 = vmatpush1.msra.mxu0 0.0
        %1187 = vmatprep.subr.mxu0 0.0
        %1188 = vmatpush1.msra.mxu0 0.0
        %1189 = vmatprep.subr.mxu0 0.0
        %1190 = vmatpush1.msra.mxu0 0.0
        %1191 = vmatprep.subr.mxu0 0.0
        %1192 = vmatpush1.msra.mxu0 0.0
        %1193 = vmatprep.subr.mxu0 0.0
        %1194 = vmatpush1.msra.mxu0 0.0
        %1195 = vmatprep.subr.mxu0 0.0
        %1196 = vmatpush1.msra.mxu0 0.0
        %1197 = vmatprep.subr.mxu0 0.0
        %1198 = vmatpush1.msra.mxu0 0.0
        %1199 = vmatprep.subr.mxu0 0.0
        %1200 = vmatpush1.msra.mxu0 0.0
        %1201 = vmatprep.subr.mxu0 0.0
        %1202 = vmatpush1.msra.mxu0 0.0
        %1203 = vmatprep.subr.mxu0 0.0
        %1204 = vmatpush1.msra.mxu0 0.0
        %1205 = vmatprep.subr.mxu0 0.0
        %1206 = vmatpush1.msra.mxu0 0.0
        %1207 = vmatprep.subr.mxu0 0.0
        %1208 = vmatpush1.msra.mxu0 0.0
        %1209 = vmatprep.subr.mxu0 0.0
        %1210 = vmatpush1.msra.mxu0 0.0
        %1211 = vmatprep.subr.mxu0 0.0
        %1212 = vmatpush1.msra.mxu0 0.0
        %1213 = vmatprep.subr.mxu0 0.0
        %1214 = vmatpush1.msra.mxu0 0.0
        %1215 = vmatprep.subr.mxu0 0.0
        %1216 = vmatpush1.msra.mxu0 0.0
        %1217 = vmatprep.subr.mxu0 0.0
        %1218 = vmatpush1.msra.mxu0 0.0
        %1219 = vmatprep.subr.mxu0 0.0
        %1220 = vmatpush1.msra.mxu0 0.0
        %1221 = vmatprep.subr.mxu0 0.0
        %1222 = vmatpush1.msra.mxu0 0.0
        %1223 = vmatprep.subr.mxu0 0.0
        %1224 = vmatpush1.msra.mxu0 0.0
        %1225 = vmatprep.subr.mxu0 0.0
        %1226 = vmatpush1.msra.mxu0 0.0
        %1227 = vmatprep.subr.mxu0 0.0
        %1228 = vmatpush1.msra.mxu0 0.0
        %1229 = vmatprep.subr.mxu0 0.0
        %1230 = vmatpush1.msra.mxu0 0.0
        %1231 = vmatprep.subr.mxu0 0.0
        %1232 = vmatpush1.msra.mxu0 0.0
        %1233 = vmatprep.subr.mxu0 0.0
        %1234 = vmatpush1.msra.mxu0 0.0
        %1235 = vmatprep.subr.mxu0 0.0
        %1236 = vmatpush1.msra.mxu0 0.0
        %1237 = vmatprep.subr.mxu0 0.0
        %1238 = vmatpush1.msra.mxu0 0.0
        %1239 = vmatprep.subr.mxu0 0.0
        %1240 = vmatpush1.msra.mxu0 0.0
        %1241 = vmatprep.subr.mxu0 0.0
        %1242 = vmatpush1.msra.mxu0 0.0
        %1243 = vmatprep.mubr.f32.mxu0 0.0
        %1244 = vmatmul.mubr.f32.gmra.mrb[0].mxu0 %v1177
        %v1245 = vpop.f32.mrb[0].mxu0
        %v1246 = vadd.f32 0.0, %v1245
        %v1247 = vpop.f32.mrb[0].mxu0
        %1248 = vdwg.mxu0
        %1249 = vrot.lane.b32.xlu0 %v260, 104
        %v1250 = vpop.permute.xlu0 %1249
        %1251 = vrot.lane.b32.xlu0 %v258, 104
        %v1252 = vpop.permute.xlu0 %1251
        %v1253 = vsel %vm261, %v1250, 0
        %v1255 = vsel %vm261, %v1252, 0
        %1257 = vmatprep.subr.mxu0 0.0
        %1258 = vmatpush1.xpose.msra.mxu0 %v1255
        %1259 = vmatprep.subr.mxu0 0.0
        %1260 = vmatpush1.xpose.msra.mxu0 0.0
        %1261 = vmatprep.subr.mxu0 0.0
        %1262 = vmatpush1.xpose.msra.mxu0 0.0
        %1263 = vmatprep.subr.mxu0 0.0
        %1264 = vmatpush1.xpose.msra.mxu0 0.0
        %1265 = vmatprep.subr.mxu0 0.0
        %1266 = vmatpush1.xpose.msra.mxu0 0.0
        %1267 = vmatprep.subr.mxu0 0.0
        %1268 = vmatpush1.xpose.msra.mxu0 0.0
        %1269 = vmatprep.subr.mxu0 0.0
        %1270 = vmatpush1.xpose.msra.mxu0 0.0
        %1271 = vmatprep.subr.mxu0 0.0
        %1272 = vmatpush1.xpose.msra.mxu0 0.0
        %1273 = vmatprep.subr.mxu0 0.0
        %1274 = vmatpush1.xpose.msra.mxu0 0.0
        %1275 = vmatprep.subr.mxu0 0.0
        %1276 = vmatpush1.xpose.msra.mxu0 0.0
        %1277 = vmatprep.subr.mxu0 0.0
        %1278 = vmatpush1.xpose.msra.mxu0 0.0
        %1279 = vmatprep.subr.mxu0 0.0
        %1280 = vmatpush1.xpose.msra.mxu0 0.0
        %1281 = vmatprep.subr.mxu0 0.0
        %1282 = vmatpush1.xpose.msra.mxu0 0.0
        %1283 = vmatprep.subr.mxu0 0.0
        %1284 = vmatpush1.xpose.msra.mxu0 0.0
        %1285 = vmatprep.subr.mxu0 0.0
        %1286 = vmatpush1.xpose.msra.mxu0 0.0
        %1287 = vmatprep.subr.mxu0 0.0
        %1288 = vmatpush1.xpose.msra.mxu0 0.0
        %1289 = vmatprep.subr.mxu0 0.0
        %1290 = vmatpush1.xpose.msra.mxu0 0.0
        %1291 = vmatprep.subr.mxu0 0.0
        %1292 = vmatpush1.xpose.msra.mxu0 0.0
        %1293 = vmatprep.subr.mxu0 0.0
        %1294 = vmatpush1.xpose.msra.mxu0 0.0
        %1295 = vmatprep.subr.mxu0 0.0
        %1296 = vmatpush1.xpose.msra.mxu0 0.0
        %1297 = vmatprep.subr.mxu0 0.0
        %1298 = vmatpush1.xpose.msra.mxu0 0.0
        %1299 = vmatprep.subr.mxu0 0.0
        %1300 = vmatpush1.xpose.msra.mxu0 0.0
        %1301 = vmatprep.subr.mxu0 0.0
        %1302 = vmatpush1.xpose.msra.mxu0 0.0
        %1303 = vmatprep.subr.mxu0 0.0
        %1304 = vmatpush1.xpose.msra.mxu0 0.0
        %1305 = vmatprep.subr.mxu0 0.0
        %1306 = vmatpush1.xpose.msra.mxu0 0.0
        %1307 = vmatprep.subr.mxu0 0.0
        %1308 = vmatpush1.xpose.msra.mxu0 0.0
        %1309 = vmatprep.subr.mxu0 0.0
        %1310 = vmatpush1.xpose.msra.mxu0 0.0
        %1311 = vmatprep.subr.mxu0 0.0
        %1312 = vmatpush1.xpose.msra.mxu0 0.0
        %1313 = vmatprep.subr.mxu0 0.0
        %1314 = vmatpush1.xpose.msra.mxu0 0.0
        %1315 = vmatprep.subr.mxu0 0.0
        %1316 = vmatpush1.xpose.msra.mxu0 0.0
        %1317 = vmatprep.subr.mxu0 0.0
        %1318 = vmatpush1.xpose.msra.mxu0 0.0
        %1319 = vmatprep.subr.mxu0 0.0
        %1320 = vmatpush1.xpose.msra.mxu0 0.0
        %1321 = vmatprep.mubr.f32.mxu0 0.0
        %1322 = vmatmul.mubr.f32.gmra.mrb[0].mxu0 %v1253
        %v1323 = vpop.f32.mrb[0].mxu0
        %v1324 = vadd.f32 0.0, %v1323
        %v1325 = vpop.f32.mrb[0].mxu0
        %1326 = vdwg.mxu0
        %v1327 = vsel %vm338, %v1324, -inf
        %1328 = vmax.xlane.f32.xlu0 %v1327
        %v1329 = vpop.xlane.xlu0 %1328
        %v1330 = vsub.f32 %v1324, %v1329
        %v1331 = vmul.f32 %v1330, 1.442695
        %v1332 = vpow.pop %v1331
        %v1333 = vsel %vm338, %v1332, 0.0
        %1334 = vadd.xlane.f32.xlu0 %v1333
        %v1335 = vpop.xlane.xlu0 %1334
        %v1336 = vrcp.pop %v1335
        %v1337 = vmul.f32 %v1332, %v1336
        %1338 = vrot.lane.b32.xlu0 %v259, 104
        %v1339 = vpop.permute.xlu0 %1338
        %v1342 = vsel %vm338, %v1337, 0
        %1344 = vmatprep.subr.mxu0 0.0
        %1345 = vmatpush1.msra.mxu0 %v1339
        %1346 = vmatprep.subr.mxu0 0.0
        %1347 = vmatpush1.msra.mxu0 0.0
        %1348 = vmatprep.subr.mxu0 0.0
        %1349 = vmatpush1.msra.mxu0 0.0
        %1350 = vmatprep.subr.mxu0 0.0
        %1351 = vmatpush1.msra.mxu0 0.0
        %1352 = vmatprep.subr.mxu0 0.0
        %1353 = vmatpush1.msra.mxu0 0.0
        %1354 = vmatprep.subr.mxu0 0.0
        %1355 = vmatpush1.msra.mxu0 0.0
        %1356 = vmatprep.subr.mxu0 0.0
        %1357 = vmatpush1.msra.mxu0 0.0
        %1358 = vmatprep.subr.mxu0 0.0
        %1359 = vmatpush1.msra.mxu0 0.0
        %1360 = vmatprep.subr.mxu0 0.0
        %1361 = vmatpush1.msra.mxu0 0.0
        %1362 = vmatprep.subr.mxu0 0.0
        %1363 = vmatpush1.msra.mxu0 0.0
        %1364 = vmatprep.subr.mxu0 0.0
        %1365 = vmatpush1.msra.mxu0 0.0
        %1366 = vmatprep.subr.mxu0 0.0
        %1367 = vmatpush1.msra.mxu0 0.0
        %1368 = vmatprep.subr.mxu0 0.0
        %1369 = vmatpush1.msra.mxu0 0.0
        %1370 = vmatprep.subr.mxu0 0.0
        %1371 = vmatpush1.msra.mxu0 0.0
        %1372 = vmatprep.subr.mxu0 0.0
        %1373 = vmatpush1.msra.mxu0 0.0
        %1374 = vmatprep.subr.mxu0 0.0
        %1375 = vmatpush1.msra.mxu0 0.0
        %1376 = vmatprep.subr.mxu0 0.0
        %1377 = vmatpush1.msra.mxu0 0.0
        %1378 = vmatprep.subr.mxu0 0.0
        %1379 = vmatpush1.msra.mxu0 0.0
        %1380 = vmatprep.subr.mxu0 0.0
        %1381 = vmatpush1.msra.mxu0 0.0
        %1382 = vmatprep.subr.mxu0 0.0
        %1383 = vmatpush1.msra.mxu0 0.0
        %1384 = vmatprep.subr.mxu0 0.0
        %1385 = vmatpush1.msra.mxu0 0.0
        %1386 = vmatprep.subr.mxu0 0.0
        %1387 = vmatpush1.msra.mxu0 0.0
        %1388 = vmatprep.subr.mxu0 0.0
        %1389 = vmatpush1.msra.mxu0 0.0
        %1390 = vmatprep.subr.mxu0 0.0
        %1391 = vmatpush1.msra.mxu0 0.0
        %1392 = vmatprep.subr.mxu0 0.0
        %1393 = vmatpush1.msra.mxu0 0.0
        %1394 = vmatprep.subr.mxu0 0.0
        %1395 = vmatpush1.msra.mxu0 0.0
        %1396 = vmatprep.subr.mxu0 0.0
        %1397 = vmatpush1.msra.mxu0 0.0
        %1398 = vmatprep.subr.mxu0 0.0
        %1399 = vmatpush1.msra.mxu0 0.0
        %1400 = vmatprep.subr.mxu0 0.0
        %1401 = vmatpush1.msra.mxu0 0.0
        %1402 = vmatprep.subr.mxu0 0.0
        %1403 = vmatpush1.msra.mxu0 0.0
        %1404 = vmatprep.subr.mxu0 0.0
        %1405 = vmatpush1.msra.mxu0 0.0
        %1406 = vmatprep.subr.mxu0 0.0
        %1407 = vmatpush1.msra.mxu0 0.0
        %1408 = vmatprep.mubr.f32.mxu0 0.0
        %1409 = vmatmul.mubr.f32.gmra.mrb[0].mxu0 %v1342
        %v1410 = vpop.f32.mrb[0].mxu0
        %v1411 = vadd.f32 0.0, %v1410
        %v1412 = vpop.f32.mrb[0].mxu0
        %1413 = vdwg.mxu0
        %1414 = vrot.lane.b32.xlu0 %v260, 100
        %v1415 = vpop.permute.xlu0 %1414
        %1416 = vrot.lane.b32.xlu0 %v258, 100
        %v1417 = vpop.permute.xlu0 %1416
        %v1418 = vsel %vm261, %v1415, 0
        %v1420 = vsel %vm261, %v1417, 0
        %1422 = vmatprep.subr.mxu0 0.0
        %1423 = vmatpush1.xpose.msra.mxu0 %v1420
        %1424 = vmatprep.subr.mxu0 0.0
        %1425 = vmatpush1.xpose.msra.mxu0 0.0
        %1426 = vmatprep.subr.mxu0 0.0
        %1427 = vmatpush1.xpose.msra.mxu0 0.0
        %1428 = vmatprep.subr.mxu0 0.0
        %1429 = vmatpush1.xpose.msra.mxu0 0.0
        %1430 = vmatprep.subr.mxu0 0.0
        %1431 = vmatpush1.xpose.msra.mxu0 0.0
        %1432 = vmatprep.subr.mxu0 0.0
        %1433 = vmatpush1.xpose.msra.mxu0 0.0
        %1434 = vmatprep.subr.mxu0 0.0
        %1435 = vmatpush1.xpose.msra.mxu0 0.0
        %1436 = vmatprep.subr.mxu0 0.0
        %1437 = vmatpush1.xpose.msra.mxu0 0.0
        %1438 = vmatprep.subr.mxu0 0.0
        %1439 = vmatpush1.xpose.msra.mxu0 0.0
        %1440 = vmatprep.subr.mxu0 0.0
        %1441 = vmatpush1.xpose.msra.mxu0 0.0
        %1442 = vmatprep.subr.mxu0 0.0
        %1443 = vmatpush1.xpose.msra.mxu0 0.0
        %1444 = vmatprep.subr.mxu0 0.0
        %1445 = vmatpush1.xpose.msra.mxu0 0.0
        %1446 = vmatprep.subr.mxu0 0.0
        %1447 = vmatpush1.xpose.msra.mxu0 0.0
        %1448 = vmatprep.subr.mxu0 0.0
        %1449 = vmatpush1.xpose.msra.mxu0 0.0
        %1450 = vmatprep.subr.mxu0 0.0
        %1451 = vmatpush1.xpose.msra.mxu0 0.0
        %1452 = vmatprep.subr.mxu0 0.0
        %1453 = vmatpush1.xpose.msra.mxu0 0.0
        %1454 = vmatprep.subr.mxu0 0.0
        %1455 = vmatpush1.xpose.msra.mxu0 0.0
        %1456 = vmatprep.subr.mxu0 0.0
        %1457 = vmatpush1.xpose.msra.mxu0 0.0
        %1458 = vmatprep.subr.mxu0 0.0
        %1459 = vmatpush1.xpose.msra.mxu0 0.0
        %1460 = vmatprep.subr.mxu0 0.0
        %1461 = vmatpush1.xpose.msra.mxu0 0.0
        %1462 = vmatprep.subr.mxu0 0.0
        %1463 = vmatpush1.xpose.msra.mxu0 0.0
        %1464 = vmatprep.subr.mxu0 0.0
        %1465 = vmatpush1.xpose.msra.mxu0 0.0
        %1466 = vmatprep.subr.mxu0 0.0
        %1467 = vmatpush1.xpose.msra.mxu0 0.0
        %1468 = vmatprep.subr.mxu0 0.0
        %1469 = vmatpush1.xpose.msra.mxu0 0.0
        %1470 = vmatprep.subr.mxu0 0.0
        %1471 = vmatpush1.xpose.msra.mxu0 0.0
        %1472 = vmatprep.subr.mxu0 0.0
        %1473 = vmatpush1.xpose.msra.mxu0 0.0
        %1474 = vmatprep.subr.mxu0 0.0
        %1475 = vmatpush1.xpose.msra.mxu0 0.0
        %1476 = vmatprep.subr.mxu0 0.0
        %1477 = vmatpush1.xpose.msra.mxu0 0.0
        %1478 = vmatprep.subr.mxu0 0.0
        %1479 = vmatpush1.xpose.msra.mxu0 0.0
        %1480 = vmatprep.subr.mxu0 0.0
        %1481 = vmatpush1.xpose.msra.mxu0 0.0
        %1482 = vmatprep.subr.mxu0 0.0
        %1483 = vmatpush1.xpose.msra.mxu0 0.0
        %1484 = vmatprep.subr.mxu0 0.0
        %1485 = vmatpush1.xpose.msra.mxu0 0.0
        %1486 = vmatprep.mubr.f32.mxu0 0.0
        %1487 = vmatmul.mubr.f32.gmra.mrb[0].mxu0 %v1418
        %v1488 = vpop.f32.mrb[0].mxu0
        %v1489 = vadd.f32 0.0, %v1488
        %v1490 = vpop.f32.mrb[0].mxu0
        %1491 = vdwg.mxu0
        %v1492 = vsel %vm338, %v1489, -inf
        %1493 = vmax.xlane.f32.xlu0 %v1492
        %v1494 = vpop.xlane.xlu0 %1493
        %v1495 = vsub.f32 %v1489, %v1494
        %v1496 = vmul.f32 %v1495, 1.442695
        %v1497 = vpow.pop %v1496
        %v1498 = vsel %vm338, %v1497, 0.0
        %1499 = vadd.xlane.f32.xlu0 %v1498
        %v1500 = vpop.xlane.xlu0 %1499
        %v1501 = vrcp.pop %v1500
        %v1502 = vmul.f32 %v1497, %v1501
        %1503 = vrot.lane.b32.xlu0 %v259, 100
        %v1504 = vpop.permute.xlu0 %1503
        %v1507 = vsel %vm338, %v1502, 0
        %1509 = vmatprep.subr.mxu0 0.0
        %1510 = vmatpush1.msra.mxu0 %v1504
        %1511 = vmatprep.subr.mxu0 0.0
        %1512 = vmatpush1.msra.mxu0 0.0
        %1513 = vmatprep.subr.mxu0 0.0
        %1514 = vmatpush1.msra.mxu0 0.0
        %1515 = vmatprep.subr.mxu0 0.0
        %1516 = vmatpush1.msra.mxu0 0.0
        %1517 = vmatprep.subr.mxu0 0.0
        %1518 = vmatpush1.msra.mxu0 0.0
        %1519 = vmatprep.subr.mxu0 0.0
        %1520 = vmatpush1.msra.mxu0 0.0
        %1521 = vmatprep.subr.mxu0 0.0
        %1522 = vmatpush1.msra.mxu0 0.0
        %1523 = vmatprep.subr.mxu0 0.0
        %1524 = vmatpush1.msra.mxu0 0.0
        %1525 = vmatprep.subr.mxu0 0.0
        %1526 = vmatpush1.msra.mxu0 0.0
        %1527 = vmatprep.subr.mxu0 0.0
        %1528 = vmatpush1.msra.mxu0 0.0
        %1529 = vmatprep.subr.mxu0 0.0
        %1530 = vmatpush1.msra.mxu0 0.0
        %1531 = vmatprep.subr.mxu0 0.0
        %1532 = vmatpush1.msra.mxu0 0.0
        %1533 = vmatprep.subr.mxu0 0.0
        %1534 = vmatpush1.msra.mxu0 0.0
        %1535 = vmatprep.subr.mxu0 0.0
        %1536 = vmatpush1.msra.mxu0 0.0
        %1537 = vmatprep.subr.mxu0 0.0
        %1538 = vmatpush1.msra.mxu0 0.0
        %1539 = vmatprep.subr.mxu0 0.0
        %1540 = vmatpush1.msra.mxu0 0.0
        %1541 = vmatprep.subr.mxu0 0.0
        %1542 = vmatpush1.msra.mxu0 0.0
        %1543 = vmatprep.subr.mxu0 0.0
        %1544 = vmatpush1.msra.mxu0 0.0
        %1545 = vmatprep.subr.mxu0 0.0
        %1546 = vmatpush1.msra.mxu0 0.0
        %1547 = vmatprep.subr.mxu0 0.0
        %1548 = vmatpush1.msra.mxu0 0.0
        %1549 = vmatprep.subr.mxu0 0.0
        %1550 = vmatpush1.msra.mxu0 0.0
        %1551 = vmatprep.subr.mxu0 0.0
        %1552 = vmatpush1.msra.mxu0 0.0
        %1553 = vmatprep.subr.mxu0 0.0
        %1554 = vmatpush1.msra.mxu0 0.0
        %1555 = vmatprep.subr.mxu0 0.0
        %1556 = vmatpush1.msra.mxu0 0.0
        %1557 = vmatprep.subr.mxu0 0.0
        %1558 = vmatpush1.msra.mxu0 0.0
        %1559 = vmatprep.subr.mxu0 0.0
        %1560 = vmatpush1.msra.mxu0 0.0
        %1561 = vmatprep.subr.mxu0 0.0
        %1562 = vmatpush1.msra.mxu0 0.0
        %1563 = vmatprep.subr.mxu0 0.0
        %1564 = vmatpush1.msra.mxu0 0.0
        %1565 = vmatprep.subr.mxu0 0.0
        %1566 = vmatpush1.msra.mxu0 0.0
        %1567 = vmatprep.subr.mxu0 0.0
        %1568 = vmatpush1.msra.mxu0 0.0
        %1569 = vmatprep.subr.mxu0 0.0
        %1570 = vmatpush1.msra.mxu0 0.0
        %1571 = vmatprep.subr.mxu0 0.0
        %1572 = vmatpush1.msra.mxu0 0.0
        %1573 = vmatprep.mubr.f32.mxu0 0.0
        %1574 = vmatmul.mubr.f32.gmra.mrb[0].mxu0 %v1507
        %v1575 = vpop.f32.mrb[0].mxu0
        %v1576 = vadd.f32 0.0, %v1575
        %v1577 = vpop.f32.mrb[0].mxu0
        %1578 = vdwg.mxu0
        %1580 = vrot.lane.b32.xlu0 %v586, 4
        %v1581 = vpop.permute.xlu0 %1580
        %1584 = vrot.lane.b32.xlu0 %v751, 8
        %v1585 = vpop.permute.xlu0 %1584
        %1588 = vrot.lane.b32.xlu0 %v916, 12
        %v1589 = vpop.permute.xlu0 %1588
        %1592 = vrot.lane.b32.xlu0 %v1081, 16
        %v1593 = vpop.permute.xlu0 %1592
        %1596 = vrot.lane.b32.xlu0 %v1246, 20
        %v1597 = vpop.permute.xlu0 %1596
        %1600 = vrot.lane.b32.xlu0 %v1411, 24
        %v1601 = vpop.permute.xlu0 %1600
        %1604 = vrot.lane.b32.xlu0 %v1576, 28
        %v1605 = vpop.permute.xlu0 %1604
        %v1607 = vsel %vm261, %v420, %v1581
        %v1608 = vsel %vm338, %v1607, %v1585
        %vm1609 = vcmask 97280
        %v1610 = vsel %vm1609, %v1608, %v1589
        %vm1611 = vcmask 130048
        %v1612 = vsel %vm1611, %v1610, %v1593
        %vm1613 = vcmask 162816
        %v1614 = vsel %vm1613, %v1612, %v1597
        %vm1615 = vcmask 195584
        %v1616 = vsel %vm1615, %v1614, %v1601
        %vm1617 = vcmask 228352
        %v1618 = vsel %vm1617, %v1616, %v1605
        %vm1619 = vcmask 261120
        %1620 = vst.msk [vmem:[%s256] sm:$0xff] %vm1619, %v1618
        %s1621 = sand.u32 %s109, 1
        %s1622 = scalar_lea.sflag [#allocation4], %s1621
        %s1623 = sand.u32 %s109, 1
        %s1624 = smul.addr %s1623, 8
        %s1625 = scalar_lea.vmem [#allocation8], %s1624
        // Predicated region
        $region45: #{tpu_custom_call.1} parent=31 // pred_check
          %p1626 = pneg %p119
        $region46: #{tpu_custom_call.1} parent=31 // pred_check_branch
          %1628 = sbr.rel (%p1626) target = $region48
        $region47: #{tpu_custom_call.1} parent=31 // pred_region
          %s1630 = ssub.s32 128, 128
          %1631 = vsyncadd %s1622, %s1630
          %s1632 = smul.addr %s23, 128
          %s1633 = scalar_lea.hbm %s3, %s1632
          %s1635 = sshll.u32 %s1625, 4
          %s1636 = int_to_ptr.vmem [resolvable:$true] %s1635
          %1638 = dma.vmem_to_hbm [thread:$0]  %s1636, 128, %s1633, %s1622
        $region48: #{tpu_custom_call.1} parent=31 // pred_fallthru
          _
      $region32: #{tpu_custom_call.1} parent=5 // pred_fallthru
        _
      %p1639 = scmp.le.s32.totalorder 2, %s18
      // Predicated region
      $region49: #{tpu_custom_call.1} parent=5 // pred_check
        %p1640 = pneg %p1639
      $region50: #{tpu_custom_call.1} parent=5 // pred_check_branch
        %1642 = sbr.rel (%p1640) target = $region52
      $region51: #{tpu_custom_call.1} parent=5 // pred_region
        %s1643 = ssub.s32 %s18, 2
        // Predicated region
        $region53: #{tpu_custom_call.1} parent=51 // pred_check
          %p1644 = pneg %p125
        $region54: #{tpu_custom_call.1} parent=51 // pred_check_branch
          %1646 = sbr.rel (%p1644) target = $region56
        $region55: #{tpu_custom_call.1} parent=51 // pred_region
          %s1647 = sand.u32 %s110, 1
          %s1648 = scalar_lea.sflag [#allocation4], %s1647
          %s1649 = sand.u32 %s110, 1
          %s1650 = smul.addr %s1649, 8
          %s1651 = scalar_lea.vmem [#allocation8], %s1650
          %1652 = dma.done %s1648, 128
        $region56: #{tpu_custom_call.1} parent=51 // pred_fallthru
          _
      $region52: #{tpu_custom_call.1} parent=5 // pred_fallthru
        _
    $region6: #{tpu_custom_call.1} parent=1 // loop_footer
      %s22 = sadd.s32 1, %s18
    $region7: #{tpu_custom_call.1} parent=1 // loop_footer_branch
      %17 = sbr.rel target = $region3
    $region8: #{tpu_custom_call.1} parent=1 // loop_exit
      _
    %1653 = vsyncpa [#allocation3], 1
    %s1654 = scalar_lea.sflag [#allocation3], 1
    %1655 = vsyncpa %s1654, 1
    %1656 = vsyncpa [#allocation6], 1
    %s1657 = scalar_lea.sflag [#allocation6], 1
    %1658 = vsyncpa %s1657, 1
    %1659 = vsyncpa [#allocation4], 1
    %s1660 = scalar_lea.sflag [#allocation4], 1
    %1661 = vsyncpa %s1660, 1

</llo_original>
